<compile_context>
chip_gen: v7x
topology: tpu7x:2x2x1
jax: 0.10.0
libtpu: 0.0.40
codegen_flags: <defaults>
</compile_context>

<pallas_src>
import functools

import jax
import jax.numpy as jnp
from jax.experimental import pallas as pl
from jax.experimental.pallas import tpu as pltpu


def _round_up(x, m):
    return ((x + m - 1) // m) * m


def _ffn_kernel(x_ref, w1_ref, b1_ref, w2_ref, p_ref, o_ref, *,
                eps: float, compute_dtype):
    # One row-tile of tokens; full (bf16) weight matrices resident in VMEM.
    x = x_ref[...]                                   # (tm, D), stream dtype (bf16)

    # linear1 (bf16 MXU inputs, f32 accumulation)
    h = jnp.dot(x.astype(compute_dtype), w1_ref[...],
                preferred_element_type=jnp.float32)            # (tm, F) f32
    # Bias + ReLU in f32, then down-cast immediately so the (tm, F) staging
    # buffer feeding the second matmul is 2 B/elem instead of 4 B/elem.
    h = jnp.maximum(h + b1_ref[...].astype(jnp.float32), 0.0).astype(compute_dtype)

    # linear2 (bf16 MXU inputs, f32 accumulation)
    y = jnp.dot(h, w2_ref[...], preferred_element_type=jnp.float32)  # (tm, D) f32

    b2 = p_ref[0:1, :]                               # (1, D) f32
    gamma = p_ref[1:2, :]                            # (1, D) f32
    beta = p_ref[2:3, :]                             # (1, D) f32

    # Residual + LayerNorm in f32 (v5e VPU has no bf16; preserves accuracy).
    z = x.astype(jnp.float32) + y + b2
    mean = jnp.mean(z, axis=-1, keepdims=True)
    zc = z - mean
    var = jnp.mean(zc * zc, axis=-1, keepdims=True)
    inv = jax.lax.rsqrt(var + eps)
    o_ref[...] = (zc * inv * gamma + beta).astype(o_ref.dtype)


def _pick_tile_rows(n):
    # >= 2 grid steps whenever N is non-trivial so the "parallel" grid axis
    # can be sharded across both v7x TensorCores (costs nothing on v5e/v6e).
    if n <= 8:
        return 8
    if n <= 1024:
        return _round_up(pl.cdiv(n, 2), 8)
    # Large-N streaming regime: 512 rows (multiple of 256 keeps the 256-wide
    # MXU weight push/drain cadence amortized; ~85% of HBM roofline measured).
    return 512


def _vmem_limit_bytes(tile_rows, d, f, stream_bytes, out_bytes, single_buffer):
    wbuf = 1 if single_buffer else 2
    need = (
        2 * tile_rows * d * stream_bytes          # double-buffered x tiles
        + 2 * tile_rows * d * out_bytes           # double-buffered out tiles
        + wbuf * (d * f + f * d) * 2              # bf16 W1 + W2
        + wbuf * (f * 4 + 3 * d * 4)              # b1 + (b2, gamma, beta) in f32
        + tile_rows * f * (4 + 2)                 # inter-matmul hidden (f32 + bf16)
        + 6 * tile_rows * d * 4                   # f32 residual / LayerNorm temps
    )
    # Generous headroom for compiler scratch; cap at v7x physical VMEM (64 MiB).
    return int(min(64 << 20, max(32 << 20, 2 * need + (4 << 20))))


def ffn_layer(tgt, w1, b1, w2, b2, ln_w, ln_b, *, eps=1e-5, tile_rows=None,
              compute_dtype=jnp.bfloat16, single_buffer_consts=True):
    """FFNLayer.forward_post (normalize_before=False, dropout=0).

    tgt: (L, B, D).  w1: (D, F) == linear1.weight.T, w2: (F, D) == linear2.weight.T.
    Returns (L, B, D) in tgt.dtype.
    """
    L, B, D = tgt.shape
    F_ = w1.shape[1]
    N = L * B

    if tile_rows is None:
        tile_rows = _pick_tile_rows(N)
    tile_rows = max(8, min(tile_rows, _round_up(N, 8)))
    # No host-side padding: ragged last block handled by the Pallas pipeline.
    grid = (pl.cdiv(N, tile_rows),)

    # Stream x in the (bf16) compute dtype: once weights are resident the
    # kernel is x/out HBM-streaming bound, so this halves the input bytes.
    stream_dtype = compute_dtype if tgt.dtype == jnp.float32 else tgt.dtype
    x = tgt.reshape(N, D).astype(stream_dtype)

    # Weights pre-cast to bf16 once (native MXU input width, halved VMEM/HBM).
    # TODO(synk): on v7x, fp8(e4m3) weights + per-tensor scales would halve
    # weight bytes again; needs accuracy validation so not enabled here.
    w1_c = w1.astype(compute_dtype)
    w2_c = w2.astype(compute_dtype)
    b1_2d = b1.reshape(1, F_).astype(jnp.float32)
    params = jnp.stack([b2, ln_w, ln_b], axis=0).astype(jnp.float32)  # (3, D)

    out_dtype = tgt.dtype
    kernel = functools.partial(_ffn_kernel, eps=eps, compute_dtype=compute_dtype)

    def build(single_buffer):
        const_kw = dict(pipeline_mode=pl.Buffered(1)) if single_buffer else {}
        in_specs = [
            pl.BlockSpec((tile_rows, D), lambda i: (i, 0)),            # x rows
            pl.BlockSpec((D, F_), lambda i: (0, 0), **const_kw),       # W1 (D,F) bf16
            pl.BlockSpec((1, F_), lambda i: (0, 0), **const_kw),       # b1
            pl.BlockSpec((F_, D), lambda i: (0, 0), **const_kw),       # W2 (F,D) bf16
            pl.BlockSpec((3, D), lambda i: (0, 0), **const_kw),        # b2/gamma/beta
        ]
        return pl.pallas_call(
            kernel,
            out_shape=jax.ShapeDtypeStruct((N, D), out_dtype),
            grid_spec=pltpu.PrefetchScalarGridSpec(
                num_scalar_prefetch=0,
                grid=grid,
                in_specs=in_specs,
                out_specs=pl.BlockSpec((tile_rows, D), lambda i: (i, 0)),
            ),
            compiler_params=pltpu.CompilerParams(
                dimension_semantics=("parallel",),
                vmem_limit_bytes=_vmem_limit_bytes(
                    tile_rows, D, F_, jnp.dtype(stream_dtype).itemsize,
                    jnp.dtype(out_dtype).itemsize, single_buffer)),
        )

    if single_buffer_consts:
        try:
            out = build(True)(x, w1_c, b1_2d, w2_c, params)
        except Exception:  # older JAX without BlockSpec pipeline_mode support
            out = build(False)(x, w1_c, b1_2d, w2_c, params)
    else:
        out = build(False)(x, w1_c, b1_2d, w2_c, params)

    return out.reshape(L, B, D)


def _xavier_uniform(key, shape, fan_in, fan_out, dtype=jnp.float32):
    limit = (6.0 / (fan_in + fan_out)) ** 0.5
    return jax.random.uniform(key, shape, dtype, minval=-limit, maxval=limit)


if __name__ == "__main__":
    # Small, lane-dense shapes consistent with the decoder FFN:
    # (seq=8, batch=2, d_model=128), dim_feedforward=256.
    L, B, D, Fdim = 8, 2, 128, 256

    key = jax.random.PRNGKey(0)
    k_x, k_w1, k_w2 = jax.random.split(key, 3)

    tgt = jax.random.normal(k_x, (L, B, D), dtype=jnp.float32)

    # Deterministic parameter init (xavier-uniform weights, zero biases,
    # LayerNorm weight=1 / bias=0), stored pre-transposed for the kernel:
    #   w1: (D, F) == nn.Linear(D, F).weight.T
    #   w2: (F, D) == nn.Linear(F, D).weight.T
    w1 = _xavier_uniform(k_w1, (D, Fdim), fan_in=D, fan_out=Fdim)
    b1 = jnp.zeros((Fdim,), jnp.float32)
    w2 = _xavier_uniform(k_w2, (Fdim, D), fan_in=Fdim, fan_out=D)
    b2 = jnp.zeros((D,), jnp.float32)
    ln_w = jnp.ones((D,), jnp.float32)
    ln_b = jnp.zeros((D,), jnp.float32)

    out = ffn_layer(tgt, w1, b1, w2, b2, ln_w, ln_b)
    jax.block_until_ready(out)

    # Reference matching the kernel's mixed precision (bf16-streamed x, bf16
    # MXU inputs, f32 accumulation, f32 residual + LayerNorm).
    def ref_matched(x):
        xs = x.astype(jnp.bfloat16)
        h = jnp.dot(xs, w1.astype(jnp.bfloat16),
                    preferred_element_type=jnp.float32) + b1
        h = jnp.maximum(h, 0.0).astype(jnp.bfloat16)
        y = jnp.dot(h, w2.astype(jnp.bfloat16),
                    preferred_element_type=jnp.float32) + b2
        z = xs.astype(jnp.float32) + y
        mu = z.mean(-1, keepdims=True)
        var = ((z - mu) ** 2).mean(-1, keepdims=True)
        return (z - mu) * jax.lax.rsqrt(var + 1e-5) * ln_w + ln_b

    # Pure-f32 reference (forward_post semantics) for a looser sanity check.
    def ref_f32(x):
        h = jnp.maximum(x @ w1 + b1, 0.0)
        y = h @ w2 + b2
        z = x + y
        mu = z.mean(-1, keepdims=True)
        var = ((z - mu) ** 2).mean(-1, keepdims=True)
        return (z - mu) / jnp.sqrt(var + 1e-5) * ln_w + ln_b

    exp_matched = ref_matched(tgt)
    exp_f32 = ref_f32(tgt)
    assert jnp.allclose(out, exp_matched, atol=2e-3, rtol=2e-3), \
        "mismatch vs matched-precision reference"
    assert jnp.allclose(out, exp_f32, atol=5e-2), \
        "mismatch vs f32 reference"

    print("KERNEL_OK")
</pallas_src>

<mosaic_0001>
module attributes {stable_mosaic.version = 11 : i64} {
  func.func @_ffn_kernel(%arg0: i32, %arg1: memref<8x128xbf16, #tpu.memory_space<vmem>>, %arg2: memref<128x256xbf16, #tpu.memory_space<vmem>>, %arg3: memref<1x256xf32, #tpu.memory_space<vmem>>, %arg4: memref<256x128xbf16, #tpu.memory_space<vmem>>, %arg5: memref<3x128xf32, #tpu.memory_space<vmem>>, %arg6: memref<8x128xf32, #tpu.memory_space<vmem>>) attributes {dimension_semantics = [#tpu.dimension_semantics<parallel>], iteration_bounds = array<i64: 2>, scalar_prefetch = 0 : i64, scratch_operands = 0 : i64, tpu.core_type = #tpu.core_type<tc>, window_params = [{transform_indices = @transform_0, window_bounds = array<i64: 8, 128>}, {pipeline_mode = #tpu.pipeline_mode<synchronous>, transform_indices = @transform_1, window_bounds = array<i64: 128, 256>}, {pipeline_mode = #tpu.pipeline_mode<synchronous>, transform_indices = @transform_2, window_bounds = array<i64: 1, 256>}, {pipeline_mode = #tpu.pipeline_mode<synchronous>, transform_indices = @transform_3, window_bounds = array<i64: 256, 128>}, {pipeline_mode = #tpu.pipeline_mode<synchronous>, transform_indices = @transform_4, window_bounds = array<i64: 3, 128>}, {transform_indices = @transform_5, window_bounds = array<i64: 8, 128>}]} {
    %c0 = arith.constant 0 : index
    %c0_0 = arith.constant 0 : index
    %0 = vector.load %arg1[%c0, %c0_0] : memref<8x128xbf16, #tpu.memory_space<vmem>>, vector<8x128xbf16>
    %c0_1 = arith.constant 0 : index
    %c0_2 = arith.constant 0 : index
    %1 = vector.load %arg2[%c0_1, %c0_2] : memref<128x256xbf16, #tpu.memory_space<vmem>>, vector<128x256xbf16>
    %cst = arith.constant dense<0.000000e+00> : vector<8x256xf32>
    %2 = tpu.matmul %0, %1, %cst {dimension_numbers = #tpu.dot_dimension_numbers<[1], [0], [0], [1], [0, 0, 1, 1], [], []>} : vector<8x128xbf16>, vector<128x256xbf16>, vector<8x256xf32> -> vector<8x256xf32>
    %c0_3 = arith.constant 0 : index
    %c0_4 = arith.constant 0 : index
    %3 = vector.load %arg3[%c0_3, %c0_4] : memref<1x256xf32, #tpu.memory_space<vmem>>, vector<1x256xf32>
    %4 = vector.broadcast %3 : vector<1x256xf32> to vector<8x256xf32>
    %5 = arith.addf %2, %4 : vector<8x256xf32>
    %cst_5 = arith.constant 0.000000e+00 : f32
    %6 = vector.broadcast %cst_5 : f32 to vector<8x256xf32>
    %7 = arith.maximumf %5, %6 : vector<8x256xf32>
    %8 = arith.truncf %7 : vector<8x256xf32> to vector<8x256xbf16>
    %c0_6 = arith.constant 0 : index
    %c0_7 = arith.constant 0 : index
    %9 = vector.load %arg4[%c0_6, %c0_7] : memref<256x128xbf16, #tpu.memory_space<vmem>>, vector<256x128xbf16>
    %cst_8 = arith.constant dense<0.000000e+00> : vector<8x128xf32>
    %10 = tpu.matmul %8, %9, %cst_8 {dimension_numbers = #tpu.dot_dimension_numbers<[1], [0], [0], [1], [0, 0, 1, 1], [], []>} : vector<8x256xbf16>, vector<256x128xbf16>, vector<8x128xf32> -> vector<8x128xf32>
    %c0_9 = arith.constant 0 : index
    %c0_10 = arith.constant 0 : index
    %11 = vector.load %arg5[%c0_9, %c0_10] : memref<3x128xf32, #tpu.memory_space<vmem>>, vector<1x128xf32>
    %c1 = arith.constant 1 : index
    %c0_11 = arith.constant 0 : index
    %12 = vector.load %arg5[%c1, %c0_11] : memref<3x128xf32, #tpu.memory_space<vmem>>, vector<1x128xf32>
    %c2 = arith.constant 2 : index
    %c0_12 = arith.constant 0 : index
    %13 = vector.load %arg5[%c2, %c0_12] : memref<3x128xf32, #tpu.memory_space<vmem>>, vector<1x128xf32>
    %14 = arith.extf %0 : vector<8x128xbf16> to vector<8x128xf32>
    %15 = arith.addf %14, %10 : vector<8x128xf32>
    %16 = vector.broadcast %11 : vector<1x128xf32> to vector<8x128xf32>
    %17 = arith.addf %15, %16 : vector<8x128xf32>
    %cst_13 = arith.constant dense<0.000000e+00> : vector<8xf32>
    %18 = vector.multi_reduction <add>, %17, %cst_13 [1] : vector<8x128xf32> to vector<8xf32>
    %19 = vector.shape_cast %18 : vector<8xf32> to vector<8x1xf32>
    %cst_14 = arith.constant 1.280000e+02 : f32
    %20 = vector.broadcast %cst_14 : f32 to vector<8x1xf32>
    %21 = arith.divf %19, %20 : vector<8x1xf32>
    %22 = vector.broadcast %21 : vector<8x1xf32> to vector<8x128xf32>
    %23 = arith.subf %17, %22 : vector<8x128xf32>
    %24 = arith.mulf %23, %23 : vector<8x128xf32>
    %cst_15 = arith.constant dense<0.000000e+00> : vector<8xf32>
    %25 = vector.multi_reduction <add>, %24, %cst_15 [1] : vector<8x128xf32> to vector<8xf32>
    %26 = vector.shape_cast %25 : vector<8xf32> to vector<8x1xf32>
    %cst_16 = arith.constant 1.280000e+02 : f32
    %27 = vector.broadcast %cst_16 : f32 to vector<8x1xf32>
    %28 = arith.divf %26, %27 : vector<8x1xf32>
    %cst_17 = arith.constant 9.99999974E-6 : f32
    %29 = vector.broadcast %cst_17 : f32 to vector<8x1xf32>
    %30 = arith.addf %28, %29 : vector<8x1xf32>
    %31 = math.rsqrt %30 : vector<8x1xf32>
    %32 = vector.broadcast %31 : vector<8x1xf32> to vector<8x128xf32>
    %33 = arith.mulf %23, %32 : vector<8x128xf32>
    %34 = vector.broadcast %12 : vector<1x128xf32> to vector<8x128xf32>
    %35 = arith.mulf %33, %34 : vector<8x128xf32>
    %36 = vector.broadcast %13 : vector<1x128xf32> to vector<8x128xf32>
    %37 = arith.addf %35, %36 : vector<8x128xf32>
    %c0_18 = arith.constant 0 : index
    %c0_19 = arith.constant 0 : index
    %38 = vector.load %arg6[%c0_18, %c0_19] : memref<8x128xf32, #tpu.memory_space<vmem>>, vector<8x128xf32>
    tpu.vector_store %arg6[%c0_18, %c0_19], %37 {strides = array<i32>} : memref<8x128xf32, #tpu.memory_space<vmem>>, vector<8x128xf32>,
    return
  }
  func.func @transform_0(%arg0: i32) -> (i32, i32) {
    %c0_i32 = arith.constant 0 : i32
    %c0_i32_0 = arith.constant 0 : i32
    return %arg0, %c0_i32 : i32, i32
  }
  func.func @transform_1(%arg0: i32) -> (i32, i32) {
    %c0_i32 = arith.constant 0 : i32
    %c0_i32_0 = arith.constant 0 : i32
    %c0_i32_1 = arith.constant 0 : i32
    return %c0_i32, %c0_i32_0 : i32, i32
  }
  func.func @transform_2(%arg0: i32) -> (i32, i32) {
    %c0_i32 = arith.constant 0 : i32
    %c0_i32_0 = arith.constant 0 : i32
    %c0_i32_1 = arith.constant 0 : i32
    return %c0_i32, %c0_i32_0 : i32, i32
  }
  func.func @transform_3(%arg0: i32) -> (i32, i32) {
    %c0_i32 = arith.constant 0 : i32
    %c0_i32_0 = arith.constant 0 : i32
    %c0_i32_1 = arith.constant 0 : i32
    return %c0_i32, %c0_i32_0 : i32, i32
  }
  func.func @transform_4(%arg0: i32) -> (i32, i32) {
    %c0_i32 = arith.constant 0 : i32
    %c0_i32_0 = arith.constant 0 : i32
    %c0_i32_1 = arith.constant 0 : i32
    return %c0_i32, %c0_i32_0 : i32, i32
  }
  func.func @transform_5(%arg0: i32) -> (i32, i32) {
    %c0_i32 = arith.constant 0 : i32
    %c0_i32_0 = arith.constant 0 : i32
    return %arg0, %c0_i32 : i32, i32
  }
}

module attributes {stable_mosaic.version = 11 : i64} {
  func.func @_ffn_kernel(%arg0: i32, %arg1: memref<8x128xbf16, #tpu.memory_space<vmem>>, %arg2: memref<128x256xbf16, #tpu.memory_space<vmem>>, %arg3: memref<1x256xf32, #tpu.memory_space<vmem>>, %arg4: memref<256x128xbf16, #tpu.memory_space<vmem>>, %arg5: memref<3x128xf32, #tpu.memory_space<vmem>>, %arg6: memref<8x128xf32, #tpu.memory_space<vmem>>) attributes {dimension_semantics = [#tpu.dimension_semantics<parallel>], iteration_bounds = array<i64: 2>, scalar_prefetch = 0 : i64, scratch_operands = 0 : i64, tpu.core_type = #tpu.core_type<tc>, window_params = [{transform_indices = @transform_0, window_bounds = array<i64: 8, 128>}, {pipeline_mode = #tpu.pipeline_mode<synchronous>, transform_indices = @transform_1, window_bounds = array<i64: 128, 256>}, {pipeline_mode = #tpu.pipeline_mode<synchronous>, transform_indices = @transform_2, window_bounds = array<i64: 1, 256>}, {pipeline_mode = #tpu.pipeline_mode<synchronous>, transform_indices = @transform_3, window_bounds = array<i64: 256, 128>}, {pipeline_mode = #tpu.pipeline_mode<synchronous>, transform_indices = @transform_4, window_bounds = array<i64: 3, 128>}, {transform_indices = @transform_5, window_bounds = array<i64: 8, 128>}]} {
    %c0 = arith.constant 0 : index
    %c0_0 = arith.constant 0 : index
    %0 = vector.load %arg1[%c0, %c0_0] : memref<8x128xbf16, #tpu.memory_space<vmem>>, vector<8x128xbf16>
    %c0_1 = arith.constant 0 : index
    %c0_2 = arith.constant 0 : index
    %1 = vector.load %arg2[%c0_1, %c0_2] : memref<128x256xbf16, #tpu.memory_space<vmem>>, vector<128x256xbf16>
    %cst = arith.constant dense<0.000000e+00> : vector<8x256xf32>
    %2 = tpu.matmul %0, %1, %cst {dimension_numbers = #tpu.dot_dimension_numbers<[1], [0], [0], [1], [0, 0, 1, 1], [], []>} : vector<8x128xbf16>, vector<128x256xbf16>, vector<8x256xf32> -> vector<8x256xf32>
    %c0_3 = arith.constant 0 : index
    %c0_4 = arith.constant 0 : index
    %3 = vector.load %arg3[%c0_3, %c0_4] : memref<1x256xf32, #tpu.memory_space<vmem>>, vector<1x256xf32>
    %4 = vector.broadcast %3 : vector<1x256xf32> to vector<8x256xf32>
    %5 = arith.addf %2, %4 : vector<8x256xf32>
    %cst_5 = arith.constant 0.000000e+00 : f32
    %6 = vector.broadcast %cst_5 : f32 to vector<8x256xf32>
    %7 = arith.maximumf %5, %6 : vector<8x256xf32>
    %8 = arith.truncf %7 : vector<8x256xf32> to vector<8x256xbf16>
    %c0_6 = arith.constant 0 : index
    %c0_7 = arith.constant 0 : index
    %9 = vector.load %arg4[%c0_6, %c0_7] : memref<256x128xbf16, #tpu.memory_space<vmem>>, vector<256x128xbf16>
    %cst_8 = arith.constant dense<0.000000e+00> : vector<8x128xf32>
    %10 = tpu.matmul %8, %9, %cst_8 {dimension_numbers = #tpu.dot_dimension_numbers<[1], [0], [0], [1], [0, 0, 1, 1], [], []>} : vector<8x256xbf16>, vector<256x128xbf16>, vector<8x128xf32> -> vector<8x128xf32>
    %c0_9 = arith.constant 0 : index
    %c0_10 = arith.constant 0 : index
    %11 = vector.load %arg5[%c0_9, %c0_10] : memref<3x128xf32, #tpu.memory_space<vmem>>, vector<1x128xf32>
    %c1 = arith.constant 1 : index
    %c0_11 = arith.constant 0 : index
    %12 = vector.load %arg5[%c1, %c0_11] : memref<3x128xf32, #tpu.memory_space<vmem>>, vector<1x128xf32>
    %c2 = arith.constant 2 : index
    %c0_12 = arith.constant 0 : index
    %13 = vector.load %arg5[%c2, %c0_12] : memref<3x128xf32, #tpu.memory_space<vmem>>, vector<1x128xf32>
    %14 = arith.extf %0 : vector<8x128xbf16> to vector<8x128xf32>
    %15 = arith.addf %14, %10 : vector<8x128xf32>
    %16 = vector.broadcast %11 : vector<1x128xf32> to vector<8x128xf32>
    %17 = arith.addf %15, %16 : vector<8x128xf32>
    %cst_13 = arith.constant dense<0.000000e+00> : vector<8xf32>
    %18 = vector.multi_reduction <add>, %17, %cst_13 [1] : vector<8x128xf32> to vector<8xf32>
    %19 = vector.shape_cast %18 : vector<8xf32> to vector<8x1xf32>
    %cst_14 = arith.constant 1.280000e+02 : f32
    %20 = vector.broadcast %cst_14 : f32 to vector<8x1xf32>
    %21 = arith.divf %19, %20 : vector<8x1xf32>
    %22 = vector.broadcast %21 : vector<8x1xf32> to vector<8x128xf32>
    %23 = arith.subf %17, %22 : vector<8x128xf32>
    %24 = arith.mulf %23, %23 : vector<8x128xf32>
    %cst_15 = arith.constant dense<0.000000e+00> : vector<8xf32>
    %25 = vector.multi_reduction <add>, %24, %cst_15 [1] : vector<8x128xf32> to vector<8xf32>
    %26 = vector.shape_cast %25 : vector<8xf32> to vector<8x1xf32>
    %cst_16 = arith.constant 1.280000e+02 : f32
    %27 = vector.broadcast %cst_16 : f32 to vector<8x1xf32>
    %28 = arith.divf %26, %27 : vector<8x1xf32>
    %cst_17 = arith.constant 9.99999974E-6 : f32
    %29 = vector.broadcast %cst_17 : f32 to vector<8x1xf32>
    %30 = arith.addf %28, %29 : vector<8x1xf32>
    %31 = math.rsqrt %30 : vector<8x1xf32>
    %32 = vector.broadcast %31 : vector<8x1xf32> to vector<8x128xf32>
    %33 = arith.mulf %23, %32 : vector<8x128xf32>
    %34 = vector.broadcast %12 : vector<1x128xf32> to vector<8x128xf32>
    %35 = arith.mulf %33, %34 : vector<8x128xf32>
    %36 = vector.broadcast %13 : vector<1x128xf32> to vector<8x128xf32>
    %37 = arith.addf %35, %36 : vector<8x128xf32>
    %c0_18 = arith.constant 0 : index
    %c0_19 = arith.constant 0 : index
    %38 = vector.load %arg6[%c0_18, %c0_19] : memref<8x128xf32, #tpu.memory_space<vmem>>, vector<8x128xf32>
    tpu.vector_store %arg6[%c0_18, %c0_19], %37 {strides = array<i32>} : memref<8x128xf32, #tpu.memory_space<vmem>>, vector<8x128xf32>,
    return
  }
  func.func @transform_0(%arg0: i32) -> (i32, i32) {
    %c0_i32 = arith.constant 0 : i32
    %c0_i32_0 = arith.constant 0 : i32
    return %arg0, %c0_i32 : i32, i32
  }
  func.func @transform_1(%arg0: i32) -> (i32, i32) {
    %c0_i32 = arith.constant 0 : i32
    %c0_i32_0 = arith.constant 0 : i32
    %c0_i32_1 = arith.constant 0 : i32
    return %c0_i32, %c0_i32_0 : i32, i32
  }
  func.func @transform_2(%arg0: i32) -> (i32, i32) {
    %c0_i32 = arith.constant 0 : i32
    %c0_i32_0 = arith.constant 0 : i32
    %c0_i32_1 = arith.constant 0 : i32
    return %c0_i32, %c0_i32_0 : i32, i32
  }
  func.func @transform_3(%arg0: i32) -> (i32, i32) {
    %c0_i32 = arith.constant 0 : i32
    %c0_i32_0 = arith.constant 0 : i32
    %c0_i32_1 = arith.constant 0 : i32
    return %c0_i32, %c0_i32_0 : i32, i32
  }
  func.func @transform_4(%arg0: i32) -> (i32, i32) {
    %c0_i32 = arith.constant 0 : i32
    %c0_i32_0 = arith.constant 0 : i32
    %c0_i32_1 = arith.constant 0 : i32
    return %c0_i32, %c0_i32_0 : i32, i32
  }
  func.func @transform_5(%arg0: i32) -> (i32, i32) {
    %c0_i32 = arith.constant 0 : i32
    %c0_i32_0 = arith.constant 0 : i32
    return %arg0, %c0_i32 : i32, i32
  }
}

</mosaic_0001>

<llo_original>
// kernel: tpu_custom_call.1
$region0: #{tpu_custom_call.1}
  #allocation0 [shape = 'u32[]', space=smem, size = 0x4, offset = 0x4, fixed_abs, tag = 'smem constant byte address 0x4 - core index']
  #allocation1 [shape = 'u32[144,128]{1,0:T(1,128)}', space=vmem, size = 0x12000, scoped, tag = 'internal scratch']
  %s0 = inlined_call_operand.hbm [shape: bf16[16,128], index: 0, kind: input, shape index: {}]
  %s1 = inlined_call_operand.hbm [shape: bf16[128,256], index: 1, kind: input, shape index: {}]
  %s2 = inlined_call_operand.vmem [shape: f32[1,256], index: 2, kind: input, shape index: {}]
  %s3 = inlined_call_operand.hbm [shape: bf16[256,128], index: 3, kind: input, shape index: {}]
  %s4 = inlined_call_operand.vmem [shape: f32[3,128], index: 4, kind: input, shape index: {}]
  %s5 = inlined_call_operand.hbm [shape: f32[16,128], index: 5, kind: output, shape index: {}]
  %s6 = sld [smem:[#allocation0]]
  $region65: #{tpu_custom_call.1} parent=0
    _
  %s8 = ssub.s32 1, %s6
  %s9 = scalar_select 0, %s8, %s6
  $region1: #{tpu_custom_call.1} parent=0
    #allocation2 [shape = 'u8[4096]{0}', space=vmem, size = 0x1000, scoped, tag = 'input window, operand 0']
    #allocation3 [shape = 's32[2]{0}', space=sflag, size = 0x8, scoped, tag = 'scoped memory for tpu_custom_call.1']
    #allocation4 [shape = 's32[2]{0}', space=sflag, size = 0x8, scoped, tag = 'scoped memory for tpu_custom_call.1']
    #allocation5 [shape = 'u8[65536]{0}', space=vmem, size = 0x10000, scoped, tag = 'input window, operand 1, single buffered']
    #allocation6 [shape = 's32[1]{0}', space=sflag, size = 0x4, scoped, tag = 'scoped memory for tpu_custom_call.1']
    #allocation7 [shape = 'u8[65536]{0}', space=vmem, size = 0x10000, scoped, tag = 'input window, operand 3, single buffered']
    #allocation8 [shape = 'u8[8192]{0}', space=vmem, size = 0x2000, scoped, tag = 'output window, operand 0']
    %10 = vsyncpa [#allocation3], 0
    %s11 = scalar_lea.sflag [#allocation3], 1
    %12 = vsyncpa %s11, 0
    %13 = vsyncpa [#allocation6], 0
    %14 = vsyncpa [#allocation4], 0
    %s15 = scalar_lea.sflag [#allocation4], 1
    %16 = vsyncpa %s15, 0
    loop: start=0, step=1, limit=4
    $region2: #{tpu_custom_call.1} parent=1 // loop_pre_header
      _
    $region3: #{tpu_custom_call.1} parent=1 // loop_header
      %s18 = sphi 0, %s22
      %p19 = scmp.ge.s32.totalorder %s18, 4
      %s28 = sphi 0, %s30
      %s31 = sphi 0, %s28
      %s32 = sphi 0, %s31
      %s48 = sphi 0, %s32
      %s52 = sphi 0, %s52
      %s54 = sphi 0, %s52
      %s55 = sphi 0, %s54
      %s69 = sphi 0, %s55
      %s73 = sphi 0, %s73
      %s75 = sphi 0, %s73
      %s76 = sphi 0, %s75
      %s90 = sphi 0, %s76
      %s94 = sphi 0, %s94
      %s96 = sphi 0, %s94
      %s97 = sphi 0, %s96
      %s111 = sphi 0, %s97
      %s115 = sphi 0, %s115
      %s117 = sphi 0, %s115
      %s118 = sphi 0, %s117
      %s132 = sphi 0, %s118
      %s138 = sphi 0, %s140
      %s141 = sphi 0, %s138
      %s142 = sphi 0, %s141
      %s158 = sphi 0, %s142
    $region4: #{tpu_custom_call.1} parent=1 // loop_header_branch
      %21 = sbr.rel (%p19) target = $region8
    $region5: #{tpu_custom_call.1} parent=1 // loop_body
      %s23 = ssub.s32 %s18, 1
      %s24 = ssub.s32 %s18, 2
      %s25 = sadd.s32 %s18, 1
      %s26 = ssub.s32 %s18, %s25
      %p27 = scmp.eq.s32.totalorder %s26, 0
      %s29 = sadd.s32 %s28, 1
      %s30 = scalar_select %p27, %s28, %s29
      %p33 = pneg %p27
      %p34 = scmp.eq.s32.totalorder %s18, 1
      %p35 = por %p33, %p34
      %p36 = scmp.ne.s32.totalorder %s28, %s31
      %p37 = scmp.eq.s32.totalorder %s18, 0
      %p38 = por %p36, %p37
      %p39 = scmp.ne.s32.totalorder %s28, %s31
      %p40 = scmp.eq.s32.totalorder %s23, 1
      %p41 = por %p39, %p40
      %p42 = scmp.ne.s32.totalorder %s31, %s32
      %p43 = scmp.eq.s32.totalorder %s23, 0
      %p44 = por %p42, %p43
      %p45 = scmp.ne.s32.totalorder %s31, %s32
      %p46 = scmp.eq.s32.totalorder %s24, 1
      %p47 = por %p45, %p46
      %p49 = scmp.ne.s32.totalorder %s32, %s48
      %p50 = scmp.eq.s32.totalorder %s24, 0
      %p51 = por %p49, %p50
      %s53 = sadd.s32 %s52, 1
      %p56 = scmp.eq.s32.totalorder %s18, 1
      %p57 = scmp.ne.s32.totalorder %s52, %s54
      %p58 = scmp.eq.s32.totalorder %s18, 0
      %p59 = por %p57, %p58
      %p60 = scmp.ne.s32.totalorder %s52, %s54
      %p61 = scmp.eq.s32.totalorder %s23, 1
      %p62 = por %p60, %p61
      %p63 = scmp.ne.s32.totalorder %s54, %s55
      %p64 = scmp.eq.s32.totalorder %s23, 0
      %p65 = por %p63, %p64
      %p66 = scmp.ne.s32.totalorder %s54, %s55
      %p67 = scmp.eq.s32.totalorder %s24, 1
      %p68 = por %p66, %p67
      %p70 = scmp.ne.s32.totalorder %s55, %s69
      %p71 = scmp.eq.s32.totalorder %s24, 0
      %p72 = por %p70, %p71
      %s74 = sadd.s32 %s73, 1
      %p77 = scmp.eq.s32.totalorder %s18, 1
      %p78 = scmp.ne.s32.totalorder %s73, %s75
      %p79 = scmp.eq.s32.totalorder %s18, 0
      %p80 = por %p78, %p79
      %p81 = scmp.ne.s32.totalorder %s73, %s75
      %p82 = scmp.eq.s32.totalorder %s23, 1
      %p83 = por %p81, %p82
      %p84 = scmp.ne.s32.totalorder %s75, %s76
      %p85 = scmp.eq.s32.totalorder %s23, 0
      %p86 = por %p84, %p85
      %p87 = scmp.ne.s32.totalorder %s75, %s76
      %p88 = scmp.eq.s32.totalorder %s24, 1
      %p89 = por %p87, %p88
      %p91 = scmp.ne.s32.totalorder %s76, %s90
      %p92 = scmp.eq.s32.totalorder %s24, 0
      %p93 = por %p91, %p92
      %s95 = sadd.s32 %s94, 1
      %p98 = scmp.eq.s32.totalorder %s18, 1
      %p99 = scmp.ne.s32.totalorder %s94, %s96
      %p100 = scmp.eq.s32.totalorder %s18, 0
      %p101 = por %p99, %p100
      %p102 = scmp.ne.s32.totalorder %s94, %s96
      %p103 = scmp.eq.s32.totalorder %s23, 1
      %p104 = por %p102, %p103
      %p105 = scmp.ne.s32.totalorder %s96, %s97
      %p106 = scmp.eq.s32.totalorder %s23, 0
      %p107 = por %p105, %p106
      %p108 = scmp.ne.s32.totalorder %s96, %s97
      %p109 = scmp.eq.s32.totalorder %s24, 1
      %p110 = por %p108, %p109
      %p112 = scmp.ne.s32.totalorder %s97, %s111
      %p113 = scmp.eq.s32.totalorder %s24, 0
      %p114 = por %p112, %p113
      %s116 = sadd.s32 %s115, 1
      %p119 = scmp.eq.s32.totalorder %s18, 1
      %p120 = scmp.ne.s32.totalorder %s115, %s117
      %p121 = scmp.eq.s32.totalorder %s18, 0
      %p122 = por %p120, %p121
      %p123 = scmp.ne.s32.totalorder %s115, %s117
      %p124 = scmp.eq.s32.totalorder %s23, 1
      %p125 = por %p123, %p124
      %p126 = scmp.ne.s32.totalorder %s117, %s118
      %p127 = scmp.eq.s32.totalorder %s23, 0
      %p128 = por %p126, %p127
      %p129 = scmp.ne.s32.totalorder %s117, %s118
      %p130 = scmp.eq.s32.totalorder %s24, 1
      %p131 = por %p129, %p130
      %p133 = scmp.ne.s32.totalorder %s118, %s132
      %p134 = scmp.eq.s32.totalorder %s24, 0
      %p135 = por %p133, %p134
      %s136 = ssub.s32 %s18, %s25
      %p137 = scmp.eq.s32.totalorder %s136, 0
      %s139 = sadd.s32 %s138, 1
      %s140 = scalar_select %p137, %s138, %s139
      %p143 = pneg %p137
      %p144 = scmp.eq.s32.totalorder %s18, 1
      %p145 = por %p143, %p144
      %p146 = scmp.ne.s32.totalorder %s138, %s141
      %p147 = scmp.eq.s32.totalorder %s18, 0
      %p148 = por %p146, %p147
      %p149 = scmp.ne.s32.totalorder %s138, %s141
      %p150 = scmp.eq.s32.totalorder %s23, 1
      %p151 = por %p149, %p150
      %p152 = scmp.ne.s32.totalorder %s141, %s142
      %p153 = scmp.eq.s32.totalorder %s23, 0
      %p154 = por %p152, %p153
      %p155 = scmp.ne.s32.totalorder %s141, %s142
      %p156 = scmp.eq.s32.totalorder %s24, 1
      %p157 = por %p155, %p156
      %p159 = scmp.ne.s32.totalorder %s142, %s158
      %p160 = scmp.eq.s32.totalorder %s24, 0
      %p161 = por %p159, %p160
      %p162 = scmp.le.s32.totalorder 1, %s18
      %p163 = scmp.lt.s32.totalorder %s18, 3
      %p164 = pnand %p162, %p163
      %p165 = pneg %p164
      // Predicated region
      $region9: #{tpu_custom_call.1} parent=5 // pred_check
        _
      $region10: #{tpu_custom_call.1} parent=5 // pred_check_branch
        %167 = sbr.rel (%p164) target = $region12
      $region11: #{tpu_custom_call.1} parent=5 // pred_region
        %s168 = ssub.s32 %s18, 1
        // Predicated region
        $region13: #{tpu_custom_call.1} parent=11 // pred_check
          %p169 = pneg %p65
        $region14: #{tpu_custom_call.1} parent=11 // pred_check_branch
          %171 = sbr.rel (%p169) target = $region16
        $region15: #{tpu_custom_call.1} parent=11 // pred_region
          %s173 = ssub.s32 2048, 2048
          %174 = vsyncadd [#allocation6], %s173
          %s175 = sshll.u32 [#allocation5], 4
          %s176 = int_to_ptr.vmem [resolvable:$true] %s175
          %181 = dma.hbm_to_vmem [thread:$0]  %s1, 2048, %s176, [#allocation6], 128, 128, 8
        $region16: #{tpu_custom_call.1} parent=11 // pred_fallthru
          _
        // Predicated region
        $region17: #{tpu_custom_call.1} parent=11 // pred_check
          %p182 = pneg %p86
        $region18: #{tpu_custom_call.1} parent=11 // pred_check_branch
          %184 = sbr.rel (%p182) target = $region20
        $region19: #{tpu_custom_call.1} parent=11 // pred_region
          _
        $region20: #{tpu_custom_call.1} parent=11 // pred_fallthru
          _
        // Predicated region
        $region21: #{tpu_custom_call.1} parent=11 // pred_check
          %p185 = pneg %p107
        $region22: #{tpu_custom_call.1} parent=11 // pred_check_branch
          %187 = sbr.rel (%p185) target = $region24
        $region23: #{tpu_custom_call.1} parent=11 // pred_region
          %s189 = ssub.s32 2048, 2048
          %190 = vsyncadd [#allocation6], %s189
          %s191 = sshll.u32 [#allocation7], 4
          %s192 = int_to_ptr.vmem [resolvable:$true] %s191
          %197 = dma.hbm_to_vmem [thread:$0]  %s3, 2048, %s192, [#allocation6], 64, 64, 4
        $region24: #{tpu_custom_call.1} parent=11 // pred_fallthru
          _
        // Predicated region
        $region25: #{tpu_custom_call.1} parent=11 // pred_check
          %p198 = pneg %p128
        $region26: #{tpu_custom_call.1} parent=11 // pred_check_branch
          %200 = sbr.rel (%p198) target = $region28
        $region27: #{tpu_custom_call.1} parent=11 // pred_region
          _
        $region28: #{tpu_custom_call.1} parent=11 // pred_fallthru
          _
      $region12: #{tpu_custom_call.1} parent=5 // pred_fallthru
        _
      %p201 = scmp.lt.s32.totalorder %s18, 2
      // Predicated region
      $region29: #{tpu_custom_call.1} parent=5 // pred_check
        %p202 = pneg %p201
      $region30: #{tpu_custom_call.1} parent=5 // pred_check_branch
        %204 = sbr.rel (%p202) target = $region32
      $region31: #{tpu_custom_call.1} parent=5 // pred_region
        // Predicated region
        $region33: #{tpu_custom_call.1} parent=31 // pred_check
          %p205 = pneg %p38
        $region34: #{tpu_custom_call.1} parent=31 // pred_check_branch
          %207 = sbr.rel (%p205) target = $region36
        $region35: #{tpu_custom_call.1} parent=31 // pred_region
          %s208 = sand.u32 %s28, 1
          %s209 = scalar_lea.sflag [#allocation3], %s208
          %s210 = sand.u32 %s28, 1
          %s211 = smul.addr %s210, 4
          %s212 = scalar_lea.vmem [#allocation2], %s211
          %s214 = ssub.s32 64, 64
          %215 = vsyncadd %s209, %s214
          %s216 = smul.addr %s18, 64
          %s217 = scalar_lea.hbm %s0, %s216
          %s219 = sshll.u32 %s212, 4
          %s220 = int_to_ptr.vmem [resolvable:$true] %s219
          %222 = dma.hbm_to_vmem [thread:$0]  %s217, 64, %s220, %s209
        $region36: #{tpu_custom_call.1} parent=31 // pred_fallthru
          _
      $region32: #{tpu_custom_call.1} parent=5 // pred_fallthru
        _
      %p223 = scmp.le.s32.totalorder 1, %s18
      %p224 = scmp.lt.s32.totalorder %s18, 3
      %p225 = pnand %p223, %p224
      %p226 = pneg %p225
      // Predicated region
      $region37: #{tpu_custom_call.1} parent=5 // pred_check
        _
      $region38: #{tpu_custom_call.1} parent=5 // pred_check_branch
        %228 = sbr.rel (%p225) target = $region40
      $region39: #{tpu_custom_call.1} parent=5 // pred_region
        %s229 = ssub.s32 %s18, 1
        %s230 = sand.u32 %s31, 1
        %s231 = scalar_lea.sflag [#allocation3], %s230
        %s232 = sand.u32 %s31, 1
        %s233 = smul.addr %s232, 4
        %s234 = scalar_lea.vmem [#allocation2], %s233
        // Predicated region
        $region41: #{tpu_custom_call.1} parent=39 // pred_check
          %p235 = pneg %p44
        $region42: #{tpu_custom_call.1} parent=39 // pred_check_branch
          %237 = sbr.rel (%p235) target = $region44
        $region43: #{tpu_custom_call.1} parent=39 // pred_region
          %238 = dma.done %s231, 64
        $region44: #{tpu_custom_call.1} parent=39 // pred_fallthru
          _
        // Predicated region
        $region45: #{tpu_custom_call.1} parent=39 // pred_check
          %p239 = pneg %p65
        $region46: #{tpu_custom_call.1} parent=39 // pred_check_branch
          %241 = sbr.rel (%p239) target = $region48
        $region47: #{tpu_custom_call.1} parent=39 // pred_region
          %242 = dma.done [#allocation6], 2048
        $region48: #{tpu_custom_call.1} parent=39 // pred_fallthru
          _
        // Predicated region
        $region49: #{tpu_custom_call.1} parent=39 // pred_check
          %p243 = pneg %p107
        $region50: #{tpu_custom_call.1} parent=39 // pred_check_branch
          %245 = sbr.rel (%p243) target = $region52
        $region51: #{tpu_custom_call.1} parent=39 // pred_region
          %246 = dma.done [#allocation6], 2048
        $region52: #{tpu_custom_call.1} parent=39 // pred_fallthru
          _
        %s247 = sand.u32 %s31, 1
        %s248 = scalar_lea.sflag [#allocation3], %s247
        %s249 = sand.u32 %s31, 1
        %s250 = smul.addr %s249, 4
        %s251 = scalar_lea.vmem [#allocation2], %s250
        %p252 = pneg %p44
        %p253 = pneg %p41
        %p254 = pneg %p65
        %p255 = pneg %p62
        %p256 = pneg %p86
        %p257 = pneg %p83
        %p258 = pneg %p107
        %p259 = pneg %p104
        %p260 = pneg %p128
        %p261 = pneg %p125
        %p262 = pneg %p154
        %p263 = pneg %p151
        %s264 = sand.u32 %s141, 1
        %s265 = scalar_lea.sflag [#allocation4], %s264
        %s266 = sand.u32 %s141, 1
        %s267 = smul.addr %s266, 8
        %s268 = scalar_lea.vmem [#allocation8], %s267
        %v270 = vld [vmem:[%s234] sm:$0xf]
        %v271 = vld [vmem:[#allocation5] sm:$0xff]
        %v272 = vld [vmem:[#allocation5 + $0x8] sm:$0xff]
        %v273 = vld [vmem:[#allocation5 + $0x10] sm:$0xff]
        %v274 = vld [vmem:[#allocation5 + $0x18] sm:$0xff]
        %v275 = vld [vmem:[#allocation5 + $0x20] sm:$0xff]
        %v276 = vld [vmem:[#allocation5 + $0x28] sm:$0xff]
        %v277 = vld [vmem:[#allocation5 + $0x30] sm:$0xff]
        %v278 = vld [vmem:[#allocation5 + $0x38] sm:$0xff]
        %v279 = vld [vmem:[#allocation5 + $0x40] sm:$0xff]
        %v280 = vld [vmem:[#allocation5 + $0x48] sm:$0xff]
        %v281 = vld [vmem:[#allocation5 + $0x50] sm:$0xff]
        %v282 = vld [vmem:[#allocation5 + $0x58] sm:$0xff]
        %v283 = vld [vmem:[#allocation5 + $0x60] sm:$0xff]
        %v284 = vld [vmem:[#allocation5 + $0x68] sm:$0xff]
        %v285 = vld [vmem:[#allocation5 + $0x70] sm:$0xff]
        %v286 = vld [vmem:[#allocation5 + $0x78] sm:$0xff]
        %v287 = vld [vmem:[%s2] sm:$0x3]
        %v289 = vlaneseq
        %v290 = vshrl.u32 %v289, 7
        %v291 = vsub.s32 0, %v290
        %v292 = vrot.slane %v287, %v291
        %v293 = vlaneseq
        %v294 = vshrl.u32 %v293, 7
        %v295 = vsub.s32 1, %v294
        %v296 = vrot.slane %v287, %v295
        %v315 = vunpack.c.l.b16 %v271
        %v316 = vunpack.c.h.b16 %v271
        %v317 = vunpack.c.l.b16 %v272
        %v318 = vunpack.c.h.b16 %v272
        %v319 = vunpack.c.l.b16 %v273
        %v320 = vunpack.c.h.b16 %v273
        %v321 = vunpack.c.l.b16 %v274
        %v322 = vunpack.c.h.b16 %v274
        %v323 = vunpack.c.l.b16 %v275
        %v324 = vunpack.c.h.b16 %v275
        %v325 = vunpack.c.l.b16 %v276
        %v326 = vunpack.c.h.b16 %v276
        %v327 = vunpack.c.l.b16 %v277
        %v328 = vunpack.c.h.b16 %v277
        %v329 = vunpack.c.l.b16 %v278
        %v330 = vunpack.c.h.b16 %v278
        %v331 = vunpack.c.l.b16 %v279
        %v332 = vunpack.c.h.b16 %v279
        %v333 = vunpack.c.l.b16 %v280
        %v334 = vunpack.c.h.b16 %v280
        %v335 = vunpack.c.l.b16 %v281
        %v336 = vunpack.c.h.b16 %v281
        %v337 = vunpack.c.l.b16 %v282
        %v338 = vunpack.c.h.b16 %v282
        %v339 = vunpack.c.l.b16 %v283
        %v340 = vunpack.c.h.b16 %v283
        %v341 = vunpack.c.l.b16 %v284
        %v342 = vunpack.c.h.b16 %v284
        %v343 = vunpack.c.l.b16 %v285
        %v344 = vunpack.c.h.b16 %v285
        %v345 = vunpack.c.l.b16 %v286
        %v346 = vunpack.c.h.b16 %v286
        %v347 = vpack.c.b16 %v317, %v315
        %v348 = vpack.c.b16 %v318, %v316
        %v349 = vpack.c.b16 %v321, %v319
        %v350 = vpack.c.b16 %v322, %v320
        %v351 = vpack.c.b16 %v325, %v323
        %v352 = vpack.c.b16 %v326, %v324
        %v353 = vpack.c.b16 %v329, %v327
        %v354 = vpack.c.b16 %v330, %v328
        %v355 = vpack.c.b16 %v333, %v331
        %v356 = vpack.c.b16 %v334, %v332
        %v357 = vpack.c.b16 %v337, %v335
        %v358 = vpack.c.b16 %v338, %v336
        %v359 = vpack.c.b16 %v341, %v339
        %v360 = vpack.c.b16 %v342, %v340
        %v361 = vpack.c.b16 %v345, %v343
        %v362 = vpack.c.b16 %v346, %v344
        %379 = vmatprep.subr.bf16.mxu0 %v348
        %380 = vmatpush1.bf16.msra.mxu0 %v347
        %381 = vmatprep.subr.bf16.mxu0 %v350
        %382 = vmatpush1.bf16.msra.mxu0 %v349
        %383 = vmatprep.subr.bf16.mxu0 %v352
        %384 = vmatpush1.bf16.msra.mxu0 %v351
        %385 = vmatprep.subr.bf16.mxu0 %v354
        %386 = vmatpush1.bf16.msra.mxu0 %v353
        %387 = vmatprep.subr.bf16.mxu0 %v356
        %388 = vmatpush1.bf16.msra.mxu0 %v355
        %389 = vmatprep.subr.bf16.mxu0 %v358
        %390 = vmatpush1.bf16.msra.mxu0 %v357
        %391 = vmatprep.subr.bf16.mxu0 %v360
        %392 = vmatpush1.bf16.msra.mxu0 %v359
        %393 = vmatprep.subr.bf16.mxu0 %v362
        %394 = vmatpush1.bf16.msra.mxu0 %v361
        %395 = vmatprep.subr.bf16.mxu0 0
        %396 = vmatpush1.bf16.msra.mxu0 0
        %397 = vmatprep.subr.bf16.mxu0 0
        %398 = vmatpush1.bf16.msra.mxu0 0
        %399 = vmatprep.subr.bf16.mxu0 0
        %400 = vmatpush1.bf16.msra.mxu0 0
        %401 = vmatprep.subr.bf16.mxu0 0
        %402 = vmatpush1.bf16.msra.mxu0 0
        %403 = vmatprep.subr.bf16.mxu0 0
        %404 = vmatpush1.bf16.msra.mxu0 0
        %405 = vmatprep.subr.bf16.mxu0 0
        %406 = vmatpush1.bf16.msra.mxu0 0
        %407 = vmatprep.subr.bf16.mxu0 0
        %408 = vmatpush1.bf16.msra.mxu0 0
        %409 = vmatprep.subr.bf16.mxu0 0
        %410 = vmatpush1.bf16.msra.mxu0 0
        %411 = vmatprep.mubr.bf16.mxu0 0
        %412 = vmatmul.mubr.bf16.gmra.mrb[0].mxu0 %v270
        %v413 = vpop.f32.mrb[0].mxu0
        %v414 = vadd.f32 %v292, %v413
        %v415 = vpop.f32.mrb[0].mxu0
        %v416 = vadd.f32 %v296, %v415
        %v417 = vpop.f32.mrb[0].mxu0
        %v418 = vpop.f32.mrb[0].mxu0
        %419 = vdwg.mxu0
        %v420 = vmax.f32 %v414, 0.0
        %v421 = vmax.f32 %v416, 0.0
        %v422 = vpack.c.bf16 %v420, %v420
        %v423 = vpack.c.bf16 %v421, %v421
        %v424 = vld [vmem:[#allocation7] sm:$0xf]
        %v425 = vld [vmem:[#allocation7 + $0x4] sm:$0xf]
        %v426 = vld [vmem:[#allocation7 + $0x8] sm:$0xf]
        %v427 = vld [vmem:[#allocation7 + $0xc] sm:$0xf]
        %v428 = vld [vmem:[#allocation7 + $0x10] sm:$0xf]
        %v429 = vld [vmem:[#allocation7 + $0x14] sm:$0xf]
        %v430 = vld [vmem:[#allocation7 + $0x18] sm:$0xf]
        %v431 = vld [vmem:[#allocation7 + $0x1c] sm:$0xf]
        %v432 = vld [vmem:[#allocation7 + $0x20] sm:$0xf]
        %v433 = vld [vmem:[#allocation7 + $0x24] sm:$0xf]
        %v434 = vld [vmem:[#allocation7 + $0x28] sm:$0xf]
        %v435 = vld [vmem:[#allocation7 + $0x2c] sm:$0xf]
        %v436 = vld [vmem:[#allocation7 + $0x30] sm:$0xf]
        %v437 = vld [vmem:[#allocation7 + $0x34] sm:$0xf]
        %v438 = vld [vmem:[#allocation7 + $0x38] sm:$0xf]
        %v439 = vld [vmem:[#allocation7 + $0x3c] sm:$0xf]
        %v440 = vld [vmem:[#allocation7 + $0x40] sm:$0xf]
        %v441 = vld [vmem:[#allocation7 + $0x44] sm:$0xf]
        %v442 = vld [vmem:[#allocation7 + $0x48] sm:$0xf]
        %v443 = vld [vmem:[#allocation7 + $0x4c] sm:$0xf]
        %v444 = vld [vmem:[#allocation7 + $0x50] sm:$0xf]
        %v445 = vld [vmem:[#allocation7 + $0x54] sm:$0xf]
        %v446 = vld [vmem:[#allocation7 + $0x58] sm:$0xf]
        %v447 = vld [vmem:[#allocation7 + $0x5c] sm:$0xf]
        %v448 = vld [vmem:[#allocation7 + $0x60] sm:$0xf]
        %v449 = vld [vmem:[#allocation7 + $0x64] sm:$0xf]
        %v450 = vld [vmem:[#allocation7 + $0x68] sm:$0xf]
        %v451 = vld [vmem:[#allocation7 + $0x6c] sm:$0xf]
        %v452 = vld [vmem:[#allocation7 + $0x70] sm:$0xf]
        %v453 = vld [vmem:[#allocation7 + $0x74] sm:$0xf]
        %v454 = vld [vmem:[#allocation7 + $0x78] sm:$0xf]
        %v455 = vld [vmem:[#allocation7 + $0x7c] sm:$0xf]
        %v488 = vunpack.c.l.b16 %v424
        %v489 = vunpack.c.l.b16 %v425
        %v490 = vunpack.c.l.b16 %v426
        %v491 = vunpack.c.l.b16 %v427
        %v492 = vunpack.c.l.b16 %v428
        %v493 = vunpack.c.l.b16 %v429
        %v494 = vunpack.c.l.b16 %v430
        %v495 = vunpack.c.l.b16 %v431
        %v496 = vunpack.c.l.b16 %v432
        %v497 = vunpack.c.l.b16 %v433
        %v498 = vunpack.c.l.b16 %v434
        %v499 = vunpack.c.l.b16 %v435
        %v500 = vunpack.c.l.b16 %v436
        %v501 = vunpack.c.l.b16 %v437
        %v502 = vunpack.c.l.b16 %v438
        %v503 = vunpack.c.l.b16 %v439
        %v504 = vunpack.c.l.b16 %v440
        %v505 = vunpack.c.l.b16 %v441
        %v506 = vunpack.c.l.b16 %v442
        %v507 = vunpack.c.l.b16 %v443
        %v508 = vunpack.c.l.b16 %v444
        %v509 = vunpack.c.l.b16 %v445
        %v510 = vunpack.c.l.b16 %v446
        %v511 = vunpack.c.l.b16 %v447
        %v512 = vunpack.c.l.b16 %v448
        %v513 = vunpack.c.l.b16 %v449
        %v514 = vunpack.c.l.b16 %v450
        %v515 = vunpack.c.l.b16 %v451
        %v516 = vunpack.c.l.b16 %v452
        %v517 = vunpack.c.l.b16 %v453
        %v518 = vunpack.c.l.b16 %v454
        %v519 = vunpack.c.l.b16 %v455
        %v520 = vpack.c.b16 %v489, %v488
        %v521 = vpack.c.b16 %v491, %v490
        %v522 = vpack.c.b16 %v493, %v492
        %v523 = vpack.c.b16 %v495, %v494
        %v524 = vpack.c.b16 %v497, %v496
        %v525 = vpack.c.b16 %v499, %v498
        %v526 = vpack.c.b16 %v501, %v500
        %v527 = vpack.c.b16 %v503, %v502
        %v528 = vpack.c.b16 %v505, %v504
        %v529 = vpack.c.b16 %v507, %v506
        %v530 = vpack.c.b16 %v509, %v508
        %v531 = vpack.c.b16 %v511, %v510
        %v532 = vpack.c.b16 %v513, %v512
        %v533 = vpack.c.b16 %v515, %v514
        %v534 = vpack.c.b16 %v517, %v516
        %v535 = vpack.c.b16 %v519, %v518
        %552 = vmatprep.subr.bf16.mxu0 0
        %553 = vmatpush1.bf16.msra.mxu0 %v520
        %554 = vmatprep.subr.bf16.mxu0 0
        %555 = vmatpush1.bf16.msra.mxu0 %v521
        %556 = vmatprep.subr.bf16.mxu0 0
        %557 = vmatpush1.bf16.msra.mxu0 %v522
        %558 = vmatprep.subr.bf16.mxu0 0
        %559 = vmatpush1.bf16.msra.mxu0 %v523
        %560 = vmatprep.subr.bf16.mxu0 0
        %561 = vmatpush1.bf16.msra.mxu0 %v524
        %562 = vmatprep.subr.bf16.mxu0 0
        %563 = vmatpush1.bf16.msra.mxu0 %v525
        %564 = vmatprep.subr.bf16.mxu0 0
        %565 = vmatpush1.bf16.msra.mxu0 %v526
        %566 = vmatprep.subr.bf16.mxu0 0
        %567 = vmatpush1.bf16.msra.mxu0 %v527
        %568 = vmatprep.subr.bf16.mxu0 0
        %569 = vmatpush1.bf16.msra.mxu0 %v528
        %570 = vmatprep.subr.bf16.mxu0 0
        %571 = vmatpush1.bf16.msra.mxu0 %v529
        %572 = vmatprep.subr.bf16.mxu0 0
        %573 = vmatpush1.bf16.msra.mxu0 %v530
        %574 = vmatprep.subr.bf16.mxu0 0
        %575 = vmatpush1.bf16.msra.mxu0 %v531
        %576 = vmatprep.subr.bf16.mxu0 0
        %577 = vmatpush1.bf16.msra.mxu0 %v532
        %578 = vmatprep.subr.bf16.mxu0 0
        %579 = vmatpush1.bf16.msra.mxu0 %v533
        %580 = vmatprep.subr.bf16.mxu0 0
        %581 = vmatpush1.bf16.msra.mxu0 %v534
        %582 = vmatprep.subr.bf16.mxu0 0
        %583 = vmatpush1.bf16.msra.mxu0 %v535
        %584 = vmatprep.mubr.bf16.mxu0 %v423
        %585 = vmatmul.mubr.bf16.gmra.mrb[0].mxu0 %v422
        %v586 = vpop.f32.mrb[0].mxu0
        %v587 = vadd.f32 0.0, %v586
        %v588 = vpop.f32.mrb[0].mxu0
        %v589 = vpop.f32.mrb[0].mxu0
        %v590 = vpop.f32.mrb[0].mxu0
        %591 = vdwg.mxu0
        %v592 = vld [vmem:[%s4] sm:$0x1]
        %v593 = vld [vmem:[%s4 + $0x1] sm:$0x1]
        %v594 = vld [vmem:[%s4 + $0x2] sm:$0x1]
        %v595 = vunpack.c.l.bf16 %v270
        %v596 = vadd.f32 %v595, %v587
        %v597 = vlaneseq
        %v598 = vshrl.u32 %v597, 7
        %v599 = vsub.s32 0, %v598
        %v600 = vrot.slane %v592, %v599
        %v601 = vadd.f32 %v596, %v600
        %602 = vadd.xlane.f32.xlu0 %v601
        %v603 = vpop.xlane.xlu0 %602
        %v604 = vrcp.pop 128.0
        %v605 = vmul.f32 %v603, %v604
        %v606 = vsub.f32 %v601, %v605
        %v607 = vmul.f32 %v606, %v606
        %608 = vadd.xlane.f32.xlu0 %v607
        %v609 = vpop.xlane.xlu0 %608
        %v610 = vmul.f32 %v609, %v604
        %v611 = vadd.f32 %v610, 1e-05
        %v612 = vrsqrt.pop %v611
        %v613 = vmul.f32 %v606, %v612
        %v614 = vlaneseq
        %v615 = vshrl.u32 %v614, 7
        %v616 = vsub.s32 0, %v615
        %v617 = vrot.slane %v593, %v616
        %v618 = vmul.f32 %v613, %v617
        %v619 = vlaneseq
        %v620 = vshrl.u32 %v619, 7
        %v621 = vsub.s32 0, %v620
        %v622 = vrot.slane %v594, %v621
        %v623 = vadd.f32 %v618, %v622
        %624 = vst [vmem:[%s268] sm:$0xff] %v623
        %s625 = sand.u32 %s141, 1
        %s626 = scalar_lea.sflag [#allocation4], %s625
        %s627 = sand.u32 %s141, 1
        %s628 = smul.addr %s627, 8
        %s629 = scalar_lea.vmem [#allocation8], %s628
        // Predicated region
        $region53: #{tpu_custom_call.1} parent=39 // pred_check
          %p630 = pneg %p151
        $region54: #{tpu_custom_call.1} parent=39 // pred_check_branch
          %632 = sbr.rel (%p630) target = $region56
        $region55: #{tpu_custom_call.1} parent=39 // pred_region
          %s634 = ssub.s32 128, 128
          %635 = vsyncadd %s626, %s634
          %s636 = smul.addr %s23, 128
          %s637 = scalar_lea.hbm %s5, %s636
          %s639 = sshll.u32 %s629, 4
          %s640 = int_to_ptr.vmem [resolvable:$true] %s639
          %642 = dma.vmem_to_hbm [thread:$0]  %s640, 128, %s637, %s626
        $region56: #{tpu_custom_call.1} parent=39 // pred_fallthru
          _
      $region40: #{tpu_custom_call.1} parent=5 // pred_fallthru
        _
      %p643 = scmp.le.s32.totalorder 2, %s18
      // Predicated region
      $region57: #{tpu_custom_call.1} parent=5 // pred_check
        %p644 = pneg %p643
      $region58: #{tpu_custom_call.1} parent=5 // pred_check_branch
        %646 = sbr.rel (%p644) target = $region60
      $region59: #{tpu_custom_call.1} parent=5 // pred_region
        %s647 = ssub.s32 %s18, 2
        // Predicated region
        $region61: #{tpu_custom_call.1} parent=59 // pred_check
          %p648 = pneg %p157
        $region62: #{tpu_custom_call.1} parent=59 // pred_check_branch
          %650 = sbr.rel (%p648) target = $region64
        $region63: #{tpu_custom_call.1} parent=59 // pred_region
          %s651 = sand.u32 %s142, 1
          %s652 = scalar_lea.sflag [#allocation4], %s651
          %s653 = sand.u32 %s142, 1
          %s654 = smul.addr %s653, 8
          %s655 = scalar_lea.vmem [#allocation8], %s654
          %656 = dma.done %s652, 128
        $region64: #{tpu_custom_call.1} parent=59 // pred_fallthru
          _
      $region60: #{tpu_custom_call.1} parent=5 // pred_fallthru
        _
    $region6: #{tpu_custom_call.1} parent=1 // loop_footer
      %s22 = sadd.s32 1, %s18
    $region7: #{tpu_custom_call.1} parent=1 // loop_footer_branch
      %17 = sbr.rel target = $region3
    $region8: #{tpu_custom_call.1} parent=1 // loop_exit
      _
    %657 = vsyncpa [#allocation3], 1
    %s658 = scalar_lea.sflag [#allocation3], 1
    %659 = vsyncpa %s658, 1
    %660 = vsyncpa [#allocation6], 1
    %661 = vsyncpa [#allocation4], 1
    %s662 = scalar_lea.sflag [#allocation4], 1
    %663 = vsyncpa %s662, 1

// kernel: tpu_custom_call.1
$region0: #{tpu_custom_call.1}
  #allocation0 [shape = 'u32[]', space=smem, size = 0x4, offset = 0x4, fixed_abs, tag = 'smem constant byte address 0x4 - core index']
  #allocation1 [shape = 'u32[144,128]{1,0:T(1,128)}', space=vmem, size = 0x12000, scoped, tag = 'internal scratch']
  %s0 = inlined_call_operand.hbm [shape: bf16[16,128], index: 0, kind: input, shape index: {}]
  %s1 = inlined_call_operand.hbm [shape: bf16[128,256], index: 1, kind: input, shape index: {}]
  %s2 = inlined_call_operand.vmem [shape: f32[1,256], index: 2, kind: input, shape index: {}]
  %s3 = inlined_call_operand.hbm [shape: bf16[256,128], index: 3, kind: input, shape index: {}]
  %s4 = inlined_call_operand.vmem [shape: f32[3,128], index: 4, kind: input, shape index: {}]
  %s5 = inlined_call_operand.hbm [shape: f32[16,128], index: 5, kind: output, shape index: {}]
  %s6 = sld [smem:[#allocation0]]
  $region65: #{tpu_custom_call.1} parent=0
    _
  %s8 = ssub.s32 1, %s6
  %s9 = scalar_select 0, %s8, %s6
  $region1: #{tpu_custom_call.1} parent=0
    #allocation2 [shape = 'u8[4096]{0}', space=vmem, size = 0x1000, scoped, tag = 'input window, operand 0']
    #allocation3 [shape = 's32[2]{0}', space=sflag, size = 0x8, scoped, tag = 'scoped memory for tpu_custom_call.1']
    #allocation4 [shape = 's32[2]{0}', space=sflag, size = 0x8, scoped, tag = 'scoped memory for tpu_custom_call.1']
    #allocation5 [shape = 'u8[65536]{0}', space=vmem, size = 0x10000, scoped, tag = 'input window, operand 1, single buffered']
    #allocation6 [shape = 's32[1]{0}', space=sflag, size = 0x4, scoped, tag = 'scoped memory for tpu_custom_call.1']
    #allocation7 [shape = 'u8[65536]{0}', space=vmem, size = 0x10000, scoped, tag = 'input window, operand 3, single buffered']
    #allocation8 [shape = 'u8[8192]{0}', space=vmem, size = 0x2000, scoped, tag = 'output window, operand 0']
    %10 = vsyncpa [#allocation3], 0
    %s11 = scalar_lea.sflag [#allocation3], 1
    %12 = vsyncpa %s11, 0
    %13 = vsyncpa [#allocation6], 0
    %14 = vsyncpa [#allocation4], 0
    %s15 = scalar_lea.sflag [#allocation4], 1
    %16 = vsyncpa %s15, 0
    loop: start=0, step=1, limit=4
    $region2: #{tpu_custom_call.1} parent=1 // loop_pre_header
      _
    $region3: #{tpu_custom_call.1} parent=1 // loop_header
      %s18 = sphi 0, %s22
      %p19 = scmp.ge.s32.totalorder %s18, 4
      %s28 = sphi 0, %s30
      %s31 = sphi 0, %s28
      %s32 = sphi 0, %s31
      %s48 = sphi 0, %s32
      %s52 = sphi 0, %s52
      %s54 = sphi 0, %s52
      %s55 = sphi 0, %s54
      %s69 = sphi 0, %s55
      %s73 = sphi 0, %s73
      %s75 = sphi 0, %s73
      %s76 = sphi 0, %s75
      %s90 = sphi 0, %s76
      %s94 = sphi 0, %s94
      %s96 = sphi 0, %s94
      %s97 = sphi 0, %s96
      %s111 = sphi 0, %s97
      %s115 = sphi 0, %s115
      %s117 = sphi 0, %s115
      %s118 = sphi 0, %s117
      %s132 = sphi 0, %s118
      %s138 = sphi 0, %s140
      %s141 = sphi 0, %s138
      %s142 = sphi 0, %s141
      %s158 = sphi 0, %s142
    $region4: #{tpu_custom_call.1} parent=1 // loop_header_branch
      %21 = sbr.rel (%p19) target = $region8
    $region5: #{tpu_custom_call.1} parent=1 // loop_body
      %s23 = ssub.s32 %s18, 1
      %s24 = ssub.s32 %s18, 2
      %s25 = sadd.s32 %s18, 1
      %s26 = ssub.s32 %s18, %s25
      %p27 = scmp.eq.s32.totalorder %s26, 0
      %s29 = sadd.s32 %s28, 1
      %s30 = scalar_select %p27, %s28, %s29
      %p33 = pneg %p27
      %p34 = scmp.eq.s32.totalorder %s18, 1
      %p35 = por %p33, %p34
      %p36 = scmp.ne.s32.totalorder %s28, %s31
      %p37 = scmp.eq.s32.totalorder %s18, 0
      %p38 = por %p36, %p37
      %p39 = scmp.ne.s32.totalorder %s28, %s31
      %p40 = scmp.eq.s32.totalorder %s23, 1
      %p41 = por %p39, %p40
      %p42 = scmp.ne.s32.totalorder %s31, %s32
      %p43 = scmp.eq.s32.totalorder %s23, 0
      %p44 = por %p42, %p43
      %p45 = scmp.ne.s32.totalorder %s31, %s32
      %p46 = scmp.eq.s32.totalorder %s24, 1
      %p47 = por %p45, %p46
      %p49 = scmp.ne.s32.totalorder %s32, %s48
      %p50 = scmp.eq.s32.totalorder %s24, 0
      %p51 = por %p49, %p50
      %s53 = sadd.s32 %s52, 1
      %p56 = scmp.eq.s32.totalorder %s18, 1
      %p57 = scmp.ne.s32.totalorder %s52, %s54
      %p58 = scmp.eq.s32.totalorder %s18, 0
      %p59 = por %p57, %p58
      %p60 = scmp.ne.s32.totalorder %s52, %s54
      %p61 = scmp.eq.s32.totalorder %s23, 1
      %p62 = por %p60, %p61
      %p63 = scmp.ne.s32.totalorder %s54, %s55
      %p64 = scmp.eq.s32.totalorder %s23, 0
      %p65 = por %p63, %p64
      %p66 = scmp.ne.s32.totalorder %s54, %s55
      %p67 = scmp.eq.s32.totalorder %s24, 1
      %p68 = por %p66, %p67
      %p70 = scmp.ne.s32.totalorder %s55, %s69
      %p71 = scmp.eq.s32.totalorder %s24, 0
      %p72 = por %p70, %p71
      %s74 = sadd.s32 %s73, 1
      %p77 = scmp.eq.s32.totalorder %s18, 1
      %p78 = scmp.ne.s32.totalorder %s73, %s75
      %p79 = scmp.eq.s32.totalorder %s18, 0
      %p80 = por %p78, %p79
      %p81 = scmp.ne.s32.totalorder %s73, %s75
      %p82 = scmp.eq.s32.totalorder %s23, 1
      %p83 = por %p81, %p82
      %p84 = scmp.ne.s32.totalorder %s75, %s76
      %p85 = scmp.eq.s32.totalorder %s23, 0
      %p86 = por %p84, %p85
      %p87 = scmp.ne.s32.totalorder %s75, %s76
      %p88 = scmp.eq.s32.totalorder %s24, 1
      %p89 = por %p87, %p88
      %p91 = scmp.ne.s32.totalorder %s76, %s90
      %p92 = scmp.eq.s32.totalorder %s24, 0
      %p93 = por %p91, %p92
      %s95 = sadd.s32 %s94, 1
      %p98 = scmp.eq.s32.totalorder %s18, 1
      %p99 = scmp.ne.s32.totalorder %s94, %s96
      %p100 = scmp.eq.s32.totalorder %s18, 0
      %p101 = por %p99, %p100
      %p102 = scmp.ne.s32.totalorder %s94, %s96
      %p103 = scmp.eq.s32.totalorder %s23, 1
      %p104 = por %p102, %p103
      %p105 = scmp.ne.s32.totalorder %s96, %s97
      %p106 = scmp.eq.s32.totalorder %s23, 0
      %p107 = por %p105, %p106
      %p108 = scmp.ne.s32.totalorder %s96, %s97
      %p109 = scmp.eq.s32.totalorder %s24, 1
      %p110 = por %p108, %p109
      %p112 = scmp.ne.s32.totalorder %s97, %s111
      %p113 = scmp.eq.s32.totalorder %s24, 0
      %p114 = por %p112, %p113
      %s116 = sadd.s32 %s115, 1
      %p119 = scmp.eq.s32.totalorder %s18, 1
      %p120 = scmp.ne.s32.totalorder %s115, %s117
      %p121 = scmp.eq.s32.totalorder %s18, 0
      %p122 = por %p120, %p121
      %p123 = scmp.ne.s32.totalorder %s115, %s117
      %p124 = scmp.eq.s32.totalorder %s23, 1
      %p125 = por %p123, %p124
      %p126 = scmp.ne.s32.totalorder %s117, %s118
      %p127 = scmp.eq.s32.totalorder %s23, 0
      %p128 = por %p126, %p127
      %p129 = scmp.ne.s32.totalorder %s117, %s118
      %p130 = scmp.eq.s32.totalorder %s24, 1
      %p131 = por %p129, %p130
      %p133 = scmp.ne.s32.totalorder %s118, %s132
      %p134 = scmp.eq.s32.totalorder %s24, 0
      %p135 = por %p133, %p134
      %s136 = ssub.s32 %s18, %s25
      %p137 = scmp.eq.s32.totalorder %s136, 0
      %s139 = sadd.s32 %s138, 1
      %s140 = scalar_select %p137, %s138, %s139
      %p143 = pneg %p137
      %p144 = scmp.eq.s32.totalorder %s18, 1
      %p145 = por %p143, %p144
      %p146 = scmp.ne.s32.totalorder %s138, %s141
      %p147 = scmp.eq.s32.totalorder %s18, 0
      %p148 = por %p146, %p147
      %p149 = scmp.ne.s32.totalorder %s138, %s141
      %p150 = scmp.eq.s32.totalorder %s23, 1
      %p151 = por %p149, %p150
      %p152 = scmp.ne.s32.totalorder %s141, %s142
      %p153 = scmp.eq.s32.totalorder %s23, 0
      %p154 = por %p152, %p153
      %p155 = scmp.ne.s32.totalorder %s141, %s142
      %p156 = scmp.eq.s32.totalorder %s24, 1
      %p157 = por %p155, %p156
      %p159 = scmp.ne.s32.totalorder %s142, %s158
      %p160 = scmp.eq.s32.totalorder %s24, 0
      %p161 = por %p159, %p160
      %p162 = scmp.le.s32.totalorder 1, %s18
      %p163 = scmp.lt.s32.totalorder %s18, 3
      %p164 = pnand %p162, %p163
      %p165 = pneg %p164
      // Predicated region
      $region9: #{tpu_custom_call.1} parent=5 // pred_check
        _
      $region10: #{tpu_custom_call.1} parent=5 // pred_check_branch
        %167 = sbr.rel (%p164) target = $region12
      $region11: #{tpu_custom_call.1} parent=5 // pred_region
        %s168 = ssub.s32 %s18, 1
        // Predicated region
        $region13: #{tpu_custom_call.1} parent=11 // pred_check
          %p169 = pneg %p65
        $region14: #{tpu_custom_call.1} parent=11 // pred_check_branch
          %171 = sbr.rel (%p169) target = $region16
        $region15: #{tpu_custom_call.1} parent=11 // pred_region
          %s173 = ssub.s32 2048, 2048
          %174 = vsyncadd [#allocation6], %s173
          %s175 = sshll.u32 [#allocation5], 4
          %s176 = int_to_ptr.vmem [resolvable:$true] %s175
          %181 = dma.hbm_to_vmem [thread:$0]  %s1, 2048, %s176, [#allocation6], 128, 128, 8
        $region16: #{tpu_custom_call.1} parent=11 // pred_fallthru
          _
        // Predicated region
        $region17: #{tpu_custom_call.1} parent=11 // pred_check
          %p182 = pneg %p86
        $region18: #{tpu_custom_call.1} parent=11 // pred_check_branch
          %184 = sbr.rel (%p182) target = $region20
        $region19: #{tpu_custom_call.1} parent=11 // pred_region
          _
        $region20: #{tpu_custom_call.1} parent=11 // pred_fallthru
          _
        // Predicated region
        $region21: #{tpu_custom_call.1} parent=11 // pred_check
          %p185 = pneg %p107
        $region22: #{tpu_custom_call.1} parent=11 // pred_check_branch
          %187 = sbr.rel (%p185) target = $region24
        $region23: #{tpu_custom_call.1} parent=11 // pred_region
          %s189 = ssub.s32 2048, 2048
          %190 = vsyncadd [#allocation6], %s189
          %s191 = sshll.u32 [#allocation7], 4
          %s192 = int_to_ptr.vmem [resolvable:$true] %s191
          %197 = dma.hbm_to_vmem [thread:$0]  %s3, 2048, %s192, [#allocation6], 64, 64, 4
        $region24: #{tpu_custom_call.1} parent=11 // pred_fallthru
          _
        // Predicated region
        $region25: #{tpu_custom_call.1} parent=11 // pred_check
          %p198 = pneg %p128
        $region26: #{tpu_custom_call.1} parent=11 // pred_check_branch
          %200 = sbr.rel (%p198) target = $region28
        $region27: #{tpu_custom_call.1} parent=11 // pred_region
          _
        $region28: #{tpu_custom_call.1} parent=11 // pred_fallthru
          _
      $region12: #{tpu_custom_call.1} parent=5 // pred_fallthru
        _
      %p201 = scmp.lt.s32.totalorder %s18, 2
      // Predicated region
      $region29: #{tpu_custom_call.1} parent=5 // pred_check
        %p202 = pneg %p201
      $region30: #{tpu_custom_call.1} parent=5 // pred_check_branch
        %204 = sbr.rel (%p202) target = $region32
      $region31: #{tpu_custom_call.1} parent=5 // pred_region
        // Predicated region
        $region33: #{tpu_custom_call.1} parent=31 // pred_check
          %p205 = pneg %p38
        $region34: #{tpu_custom_call.1} parent=31 // pred_check_branch
          %207 = sbr.rel (%p205) target = $region36
        $region35: #{tpu_custom_call.1} parent=31 // pred_region
          %s208 = sand.u32 %s28, 1
          %s209 = scalar_lea.sflag [#allocation3], %s208
          %s210 = sand.u32 %s28, 1
          %s211 = smul.addr %s210, 4
          %s212 = scalar_lea.vmem [#allocation2], %s211
          %s214 = ssub.s32 64, 64
          %215 = vsyncadd %s209, %s214
          %s216 = smul.addr %s18, 64
          %s217 = scalar_lea.hbm %s0, %s216
          %s219 = sshll.u32 %s212, 4
          %s220 = int_to_ptr.vmem [resolvable:$true] %s219
          %222 = dma.hbm_to_vmem [thread:$0]  %s217, 64, %s220, %s209
        $region36: #{tpu_custom_call.1} parent=31 // pred_fallthru
          _
      $region32: #{tpu_custom_call.1} parent=5 // pred_fallthru
        _
      %p223 = scmp.le.s32.totalorder 1, %s18
      %p224 = scmp.lt.s32.totalorder %s18, 3
      %p225 = pnand %p223, %p224
      %p226 = pneg %p225
      // Predicated region
      $region37: #{tpu_custom_call.1} parent=5 // pred_check
        _
      $region38: #{tpu_custom_call.1} parent=5 // pred_check_branch
        %228 = sbr.rel (%p225) target = $region40
      $region39: #{tpu_custom_call.1} parent=5 // pred_region
        %s229 = ssub.s32 %s18, 1
        %s230 = sand.u32 %s31, 1
        %s231 = scalar_lea.sflag [#allocation3], %s230
        %s232 = sand.u32 %s31, 1
        %s233 = smul.addr %s232, 4
        %s234 = scalar_lea.vmem [#allocation2], %s233
        // Predicated region
        $region41: #{tpu_custom_call.1} parent=39 // pred_check
          %p235 = pneg %p44
        $region42: #{tpu_custom_call.1} parent=39 // pred_check_branch
          %237 = sbr.rel (%p235) target = $region44
        $region43: #{tpu_custom_call.1} parent=39 // pred_region
          %238 = dma.done %s231, 64
        $region44: #{tpu_custom_call.1} parent=39 // pred_fallthru
          _
        // Predicated region
        $region45: #{tpu_custom_call.1} parent=39 // pred_check
          %p239 = pneg %p65
        $region46: #{tpu_custom_call.1} parent=39 // pred_check_branch
          %241 = sbr.rel (%p239) target = $region48
        $region47: #{tpu_custom_call.1} parent=39 // pred_region
          %242 = dma.done [#allocation6], 2048
        $region48: #{tpu_custom_call.1} parent=39 // pred_fallthru
          _
        // Predicated region
        $region49: #{tpu_custom_call.1} parent=39 // pred_check
          %p243 = pneg %p107
        $region50: #{tpu_custom_call.1} parent=39 // pred_check_branch
          %245 = sbr.rel (%p243) target = $region52
        $region51: #{tpu_custom_call.1} parent=39 // pred_region
          %246 = dma.done [#allocation6], 2048
        $region52: #{tpu_custom_call.1} parent=39 // pred_fallthru
          _
        %s247 = sand.u32 %s31, 1
        %s248 = scalar_lea.sflag [#allocation3], %s247
        %s249 = sand.u32 %s31, 1
        %s250 = smul.addr %s249, 4
        %s251 = scalar_lea.vmem [#allocation2], %s250
        %p252 = pneg %p44
        %p253 = pneg %p41
        %p254 = pneg %p65
        %p255 = pneg %p62
        %p256 = pneg %p86
        %p257 = pneg %p83
        %p258 = pneg %p107
        %p259 = pneg %p104
        %p260 = pneg %p128
        %p261 = pneg %p125
        %p262 = pneg %p154
        %p263 = pneg %p151
        %s264 = sand.u32 %s141, 1
        %s265 = scalar_lea.sflag [#allocation4], %s264
        %s266 = sand.u32 %s141, 1
        %s267 = smul.addr %s266, 8
        %s268 = scalar_lea.vmem [#allocation8], %s267
        %v270 = vld [vmem:[%s234] sm:$0xf]
        %v271 = vld [vmem:[#allocation5] sm:$0xff]
        %v272 = vld [vmem:[#allocation5 + $0x8] sm:$0xff]
        %v273 = vld [vmem:[#allocation5 + $0x10] sm:$0xff]
        %v274 = vld [vmem:[#allocation5 + $0x18] sm:$0xff]
        %v275 = vld [vmem:[#allocation5 + $0x20] sm:$0xff]
        %v276 = vld [vmem:[#allocation5 + $0x28] sm:$0xff]
        %v277 = vld [vmem:[#allocation5 + $0x30] sm:$0xff]
        %v278 = vld [vmem:[#allocation5 + $0x38] sm:$0xff]
        %v279 = vld [vmem:[#allocation5 + $0x40] sm:$0xff]
        %v280 = vld [vmem:[#allocation5 + $0x48] sm:$0xff]
        %v281 = vld [vmem:[#allocation5 + $0x50] sm:$0xff]
        %v282 = vld [vmem:[#allocation5 + $0x58] sm:$0xff]
        %v283 = vld [vmem:[#allocation5 + $0x60] sm:$0xff]
        %v284 = vld [vmem:[#allocation5 + $0x68] sm:$0xff]
        %v285 = vld [vmem:[#allocation5 + $0x70] sm:$0xff]
        %v286 = vld [vmem:[#allocation5 + $0x78] sm:$0xff]
        %v287 = vld [vmem:[%s2] sm:$0x3]
        %v289 = vlaneseq
        %v290 = vshrl.u32 %v289, 7
        %v291 = vsub.s32 0, %v290
        %v292 = vrot.slane %v287, %v291
        %v293 = vlaneseq
        %v294 = vshrl.u32 %v293, 7
        %v295 = vsub.s32 1, %v294
        %v296 = vrot.slane %v287, %v295
        %v315 = vunpack.c.l.b16 %v271
        %v316 = vunpack.c.h.b16 %v271
        %v317 = vunpack.c.l.b16 %v272
        %v318 = vunpack.c.h.b16 %v272
        %v319 = vunpack.c.l.b16 %v273
        %v320 = vunpack.c.h.b16 %v273
        %v321 = vunpack.c.l.b16 %v274
        %v322 = vunpack.c.h.b16 %v274
        %v323 = vunpack.c.l.b16 %v275
        %v324 = vunpack.c.h.b16 %v275
        %v325 = vunpack.c.l.b16 %v276
        %v326 = vunpack.c.h.b16 %v276
        %v327 = vunpack.c.l.b16 %v277
        %v328 = vunpack.c.h.b16 %v277
        %v329 = vunpack.c.l.b16 %v278
        %v330 = vunpack.c.h.b16 %v278
        %v331 = vunpack.c.l.b16 %v279
        %v332 = vunpack.c.h.b16 %v279
        %v333 = vunpack.c.l.b16 %v280
        %v334 = vunpack.c.h.b16 %v280
        %v335 = vunpack.c.l.b16 %v281
        %v336 = vunpack.c.h.b16 %v281
        %v337 = vunpack.c.l.b16 %v282
        %v338 = vunpack.c.h.b16 %v282
        %v339 = vunpack.c.l.b16 %v283
        %v340 = vunpack.c.h.b16 %v283
        %v341 = vunpack.c.l.b16 %v284
        %v342 = vunpack.c.h.b16 %v284
        %v343 = vunpack.c.l.b16 %v285
        %v344 = vunpack.c.h.b16 %v285
        %v345 = vunpack.c.l.b16 %v286
        %v346 = vunpack.c.h.b16 %v286
        %v347 = vpack.c.b16 %v317, %v315
        %v348 = vpack.c.b16 %v318, %v316
        %v349 = vpack.c.b16 %v321, %v319
        %v350 = vpack.c.b16 %v322, %v320
        %v351 = vpack.c.b16 %v325, %v323
        %v352 = vpack.c.b16 %v326, %v324
        %v353 = vpack.c.b16 %v329, %v327
        %v354 = vpack.c.b16 %v330, %v328
        %v355 = vpack.c.b16 %v333, %v331
        %v356 = vpack.c.b16 %v334, %v332
        %v357 = vpack.c.b16 %v337, %v335
        %v358 = vpack.c.b16 %v338, %v336
        %v359 = vpack.c.b16 %v341, %v339
        %v360 = vpack.c.b16 %v342, %v340
        %v361 = vpack.c.b16 %v345, %v343
        %v362 = vpack.c.b16 %v346, %v344
        %379 = vmatprep.subr.bf16.mxu0 %v348
        %380 = vmatpush1.bf16.msra.mxu0 %v347
        %381 = vmatprep.subr.bf16.mxu0 %v350
        %382 = vmatpush1.bf16.msra.mxu0 %v349
        %383 = vmatprep.subr.bf16.mxu0 %v352
        %384 = vmatpush1.bf16.msra.mxu0 %v351
        %385 = vmatprep.subr.bf16.mxu0 %v354
        %386 = vmatpush1.bf16.msra.mxu0 %v353
        %387 = vmatprep.subr.bf16.mxu0 %v356
        %388 = vmatpush1.bf16.msra.mxu0 %v355
        %389 = vmatprep.subr.bf16.mxu0 %v358
        %390 = vmatpush1.bf16.msra.mxu0 %v357
        %391 = vmatprep.subr.bf16.mxu0 %v360
        %392 = vmatpush1.bf16.msra.mxu0 %v359
        %393 = vmatprep.subr.bf16.mxu0 %v362
        %394 = vmatpush1.bf16.msra.mxu0 %v361
        %395 = vmatprep.subr.bf16.mxu0 0
        %396 = vmatpush1.bf16.msra.mxu0 0
        %397 = vmatprep.subr.bf16.mxu0 0
        %398 = vmatpush1.bf16.msra.mxu0 0
        %399 = vmatprep.subr.bf16.mxu0 0
        %400 = vmatpush1.bf16.msra.mxu0 0
        %401 = vmatprep.subr.bf16.mxu0 0
        %402 = vmatpush1.bf16.msra.mxu0 0
        %403 = vmatprep.subr.bf16.mxu0 0
        %404 = vmatpush1.bf16.msra.mxu0 0
        %405 = vmatprep.subr.bf16.mxu0 0
        %406 = vmatpush1.bf16.msra.mxu0 0
        %407 = vmatprep.subr.bf16.mxu0 0
        %408 = vmatpush1.bf16.msra.mxu0 0
        %409 = vmatprep.subr.bf16.mxu0 0
        %410 = vmatpush1.bf16.msra.mxu0 0
        %411 = vmatprep.mubr.bf16.mxu0 0
        %412 = vmatmul.mubr.bf16.gmra.mrb[0].mxu0 %v270
        %v413 = vpop.f32.mrb[0].mxu0
        %v414 = vadd.f32 %v292, %v413
        %v415 = vpop.f32.mrb[0].mxu0
        %v416 = vadd.f32 %v296, %v415
        %v417 = vpop.f32.mrb[0].mxu0
        %v418 = vpop.f32.mrb[0].mxu0
        %419 = vdwg.mxu0
        %v420 = vmax.f32 %v414, 0.0
        %v421 = vmax.f32 %v416, 0.0
        %v422 = vpack.c.bf16 %v420, %v420
        %v423 = vpack.c.bf16 %v421, %v421
        %v424 = vld [vmem:[#allocation7] sm:$0xf]
        %v425 = vld [vmem:[#allocation7 + $0x4] sm:$0xf]
        %v426 = vld [vmem:[#allocation7 + $0x8] sm:$0xf]
        %v427 = vld [vmem:[#allocation7 + $0xc] sm:$0xf]
        %v428 = vld [vmem:[#allocation7 + $0x10] sm:$0xf]
        %v429 = vld [vmem:[#allocation7 + $0x14] sm:$0xf]
        %v430 = vld [vmem:[#allocation7 + $0x18] sm:$0xf]
        %v431 = vld [vmem:[#allocation7 + $0x1c] sm:$0xf]
        %v432 = vld [vmem:[#allocation7 + $0x20] sm:$0xf]
        %v433 = vld [vmem:[#allocation7 + $0x24] sm:$0xf]
        %v434 = vld [vmem:[#allocation7 + $0x28] sm:$0xf]
        %v435 = vld [vmem:[#allocation7 + $0x2c] sm:$0xf]
        %v436 = vld [vmem:[#allocation7 + $0x30] sm:$0xf]
        %v437 = vld [vmem:[#allocation7 + $0x34] sm:$0xf]
        %v438 = vld [vmem:[#allocation7 + $0x38] sm:$0xf]
        %v439 = vld [vmem:[#allocation7 + $0x3c] sm:$0xf]
        %v440 = vld [vmem:[#allocation7 + $0x40] sm:$0xf]
        %v441 = vld [vmem:[#allocation7 + $0x44] sm:$0xf]
        %v442 = vld [vmem:[#allocation7 + $0x48] sm:$0xf]
        %v443 = vld [vmem:[#allocation7 + $0x4c] sm:$0xf]
        %v444 = vld [vmem:[#allocation7 + $0x50] sm:$0xf]
        %v445 = vld [vmem:[#allocation7 + $0x54] sm:$0xf]
        %v446 = vld [vmem:[#allocation7 + $0x58] sm:$0xf]
        %v447 = vld [vmem:[#allocation7 + $0x5c] sm:$0xf]
        %v448 = vld [vmem:[#allocation7 + $0x60] sm:$0xf]
        %v449 = vld [vmem:[#allocation7 + $0x64] sm:$0xf]
        %v450 = vld [vmem:[#allocation7 + $0x68] sm:$0xf]
        %v451 = vld [vmem:[#allocation7 + $0x6c] sm:$0xf]
        %v452 = vld [vmem:[#allocation7 + $0x70] sm:$0xf]
        %v453 = vld [vmem:[#allocation7 + $0x74] sm:$0xf]
        %v454 = vld [vmem:[#allocation7 + $0x78] sm:$0xf]
        %v455 = vld [vmem:[#allocation7 + $0x7c] sm:$0xf]
        %v488 = vunpack.c.l.b16 %v424
        %v489 = vunpack.c.l.b16 %v425
        %v490 = vunpack.c.l.b16 %v426
        %v491 = vunpack.c.l.b16 %v427
        %v492 = vunpack.c.l.b16 %v428
        %v493 = vunpack.c.l.b16 %v429
        %v494 = vunpack.c.l.b16 %v430
        %v495 = vunpack.c.l.b16 %v431
        %v496 = vunpack.c.l.b16 %v432
        %v497 = vunpack.c.l.b16 %v433
        %v498 = vunpack.c.l.b16 %v434
        %v499 = vunpack.c.l.b16 %v435
        %v500 = vunpack.c.l.b16 %v436
        %v501 = vunpack.c.l.b16 %v437
        %v502 = vunpack.c.l.b16 %v438
        %v503 = vunpack.c.l.b16 %v439
        %v504 = vunpack.c.l.b16 %v440
        %v505 = vunpack.c.l.b16 %v441
        %v506 = vunpack.c.l.b16 %v442
        %v507 = vunpack.c.l.b16 %v443
        %v508 = vunpack.c.l.b16 %v444
        %v509 = vunpack.c.l.b16 %v445
        %v510 = vunpack.c.l.b16 %v446
        %v511 = vunpack.c.l.b16 %v447
        %v512 = vunpack.c.l.b16 %v448
        %v513 = vunpack.c.l.b16 %v449
        %v514 = vunpack.c.l.b16 %v450
        %v515 = vunpack.c.l.b16 %v451
        %v516 = vunpack.c.l.b16 %v452
        %v517 = vunpack.c.l.b16 %v453
        %v518 = vunpack.c.l.b16 %v454
        %v519 = vunpack.c.l.b16 %v455
        %v520 = vpack.c.b16 %v489, %v488
        %v521 = vpack.c.b16 %v491, %v490
        %v522 = vpack.c.b16 %v493, %v492
        %v523 = vpack.c.b16 %v495, %v494
        %v524 = vpack.c.b16 %v497, %v496
        %v525 = vpack.c.b16 %v499, %v498
        %v526 = vpack.c.b16 %v501, %v500
        %v527 = vpack.c.b16 %v503, %v502
        %v528 = vpack.c.b16 %v505, %v504
        %v529 = vpack.c.b16 %v507, %v506
        %v530 = vpack.c.b16 %v509, %v508
        %v531 = vpack.c.b16 %v511, %v510
        %v532 = vpack.c.b16 %v513, %v512
        %v533 = vpack.c.b16 %v515, %v514
        %v534 = vpack.c.b16 %v517, %v516
        %v535 = vpack.c.b16 %v519, %v518
        %552 = vmatprep.subr.bf16.mxu0 0
        %553 = vmatpush1.bf16.msra.mxu0 %v520
        %554 = vmatprep.subr.bf16.mxu0 0
        %555 = vmatpush1.bf16.msra.mxu0 %v521
        %556 = vmatprep.subr.bf16.mxu0 0
        %557 = vmatpush1.bf16.msra.mxu0 %v522
        %558 = vmatprep.subr.bf16.mxu0 0
        %559 = vmatpush1.bf16.msra.mxu0 %v523
        %560 = vmatprep.subr.bf16.mxu0 0
        %561 = vmatpush1.bf16.msra.mxu0 %v524
        %562 = vmatprep.subr.bf16.mxu0 0
        %563 = vmatpush1.bf16.msra.mxu0 %v525
        %564 = vmatprep.subr.bf16.mxu0 0
        %565 = vmatpush1.bf16.msra.mxu0 %v526
        %566 = vmatprep.subr.bf16.mxu0 0
        %567 = vmatpush1.bf16.msra.mxu0 %v527
        %568 = vmatprep.subr.bf16.mxu0 0
        %569 = vmatpush1.bf16.msra.mxu0 %v528
        %570 = vmatprep.subr.bf16.mxu0 0
        %571 = vmatpush1.bf16.msra.mxu0 %v529
        %572 = vmatprep.subr.bf16.mxu0 0
        %573 = vmatpush1.bf16.msra.mxu0 %v530
        %574 = vmatprep.subr.bf16.mxu0 0
        %575 = vmatpush1.bf16.msra.mxu0 %v531
        %576 = vmatprep.subr.bf16.mxu0 0
        %577 = vmatpush1.bf16.msra.mxu0 %v532
        %578 = vmatprep.subr.bf16.mxu0 0
        %579 = vmatpush1.bf16.msra.mxu0 %v533
        %580 = vmatprep.subr.bf16.mxu0 0
        %581 = vmatpush1.bf16.msra.mxu0 %v534
        %582 = vmatprep.subr.bf16.mxu0 0
        %583 = vmatpush1.bf16.msra.mxu0 %v535
        %584 = vmatprep.mubr.bf16.mxu0 %v423
        %585 = vmatmul.mubr.bf16.gmra.mrb[0].mxu0 %v422
        %v586 = vpop.f32.mrb[0].mxu0
        %v587 = vadd.f32 0.0, %v586
        %v588 = vpop.f32.mrb[0].mxu0
        %v589 = vpop.f32.mrb[0].mxu0
        %v590 = vpop.f32.mrb[0].mxu0
        %591 = vdwg.mxu0
        %v592 = vld [vmem:[%s4] sm:$0x1]
        %v593 = vld [vmem:[%s4 + $0x1] sm:$0x1]
        %v594 = vld [vmem:[%s4 + $0x2] sm:$0x1]
        %v595 = vunpack.c.l.bf16 %v270
        %v596 = vadd.f32 %v595, %v587
        %v597 = vlaneseq
        %v598 = vshrl.u32 %v597, 7
        %v599 = vsub.s32 0, %v598
        %v600 = vrot.slane %v592, %v599
        %v601 = vadd.f32 %v596, %v600
        %602 = vadd.xlane.f32.xlu0 %v601
        %v603 = vpop.xlane.xlu0 %602
        %v604 = vrcp.pop 128.0
        %v605 = vmul.f32 %v603, %v604
        %v606 = vsub.f32 %v601, %v605
        %v607 = vmul.f32 %v606, %v606
        %608 = vadd.xlane.f32.xlu0 %v607
        %v609 = vpop.xlane.xlu0 %608
        %v610 = vmul.f32 %v609, %v604
        %v611 = vadd.f32 %v610, 1e-05
        %v612 = vrsqrt.pop %v611
        %v613 = vmul.f32 %v606, %v612
        %v614 = vlaneseq
        %v615 = vshrl.u32 %v614, 7
        %v616 = vsub.s32 0, %v615
        %v617 = vrot.slane %v593, %v616
        %v618 = vmul.f32 %v613, %v617
        %v619 = vlaneseq
        %v620 = vshrl.u32 %v619, 7
        %v621 = vsub.s32 0, %v620
        %v622 = vrot.slane %v594, %v621
        %v623 = vadd.f32 %v618, %v622
        %624 = vst [vmem:[%s268] sm:$0xff] %v623
        %s625 = sand.u32 %s141, 1
        %s626 = scalar_lea.sflag [#allocation4], %s625
        %s627 = sand.u32 %s141, 1
        %s628 = smul.addr %s627, 8
        %s629 = scalar_lea.vmem [#allocation8], %s628
        // Predicated region
        $region53: #{tpu_custom_call.1} parent=39 // pred_check
          %p630 = pneg %p151
        $region54: #{tpu_custom_call.1} parent=39 // pred_check_branch
          %632 = sbr.rel (%p630) target = $region56
        $region55: #{tpu_custom_call.1} parent=39 // pred_region
          %s634 = ssub.s32 128, 128
          %635 = vsyncadd %s626, %s634
          %s636 = smul.addr %s23, 128
          %s637 = scalar_lea.hbm %s5, %s636
          %s639 = sshll.u32 %s629, 4
          %s640 = int_to_ptr.vmem [resolvable:$true] %s639
          %642 = dma.vmem_to_hbm [thread:$0]  %s640, 128, %s637, %s626
        $region56: #{tpu_custom_call.1} parent=39 // pred_fallthru
          _
      $region40: #{tpu_custom_call.1} parent=5 // pred_fallthru
        _
      %p643 = scmp.le.s32.totalorder 2, %s18
      // Predicated region
      $region57: #{tpu_custom_call.1} parent=5 // pred_check
        %p644 = pneg %p643
      $region58: #{tpu_custom_call.1} parent=5 // pred_check_branch
        %646 = sbr.rel (%p644) target = $region60
      $region59: #{tpu_custom_call.1} parent=5 // pred_region
        %s647 = ssub.s32 %s18, 2
        // Predicated region
        $region61: #{tpu_custom_call.1} parent=59 // pred_check
          %p648 = pneg %p157
        $region62: #{tpu_custom_call.1} parent=59 // pred_check_branch
          %650 = sbr.rel (%p648) target = $region64
        $region63: #{tpu_custom_call.1} parent=59 // pred_region
          %s651 = sand.u32 %s142, 1
          %s652 = scalar_lea.sflag [#allocation4], %s651
          %s653 = sand.u32 %s142, 1
          %s654 = smul.addr %s653, 8
          %s655 = scalar_lea.vmem [#allocation8], %s654
          %656 = dma.done %s652, 128
        $region64: #{tpu_custom_call.1} parent=59 // pred_fallthru
          _
      $region60: #{tpu_custom_call.1} parent=5 // pred_fallthru
        _
    $region6: #{tpu_custom_call.1} parent=1 // loop_footer
      %s22 = sadd.s32 1, %s18
    $region7: #{tpu_custom_call.1} parent=1 // loop_footer_branch
      %17 = sbr.rel target = $region3
    $region8: #{tpu_custom_call.1} parent=1 // loop_exit
      _
    %657 = vsyncpa [#allocation3], 1
    %s658 = scalar_lea.sflag [#allocation3], 1
    %659 = vsyncpa %s658, 1
    %660 = vsyncpa [#allocation6], 1
    %661 = vsyncpa [#allocation4], 1
    %s662 = scalar_lea.sflag [#allocation4], 1
    %663 = vsyncpa %s662, 1

</llo_original>
